<compile_context>
chip_gen: v6e
topology: v6e:2x2x1
jax: 0.10.0
libtpu: 0.0.40
codegen_flags: <defaults>
</compile_context>

<pallas_src>
import functools

import jax
import jax.numpy as jnp
from jax import lax
from jax.experimental import pallas as pl
from jax.experimental.pallas import tpu as pltpu

# MXU operand dtype (accumulation is always float32).  bf16 is the fast MXU
# path on v5e/v6e/v7x; set to jnp.float32 for exact parity with PyTorch.
MXU_DTYPE = jnp.bfloat16


# ---------------------------------------------------------------------------
# One-time weight folding (module construction, not per call).
# ---------------------------------------------------------------------------
def fold_down_weight(w_oihw, b, dtype=MXU_DTYPE):
    """Conv2d(64,64,3,s=2,p=1) -> dense 2x2 conv over space-to-depth(2) input.

    Returns wf (2, 2*4*Cin, Cout) with per-tap row order (kw, ph, pw, ci),
    and bias (1, Cout) f32."""
    Cout, Cin, K, _ = w_oihw.shape
    w_khwc = jnp.transpose(w_oihw, (2, 3, 1, 0))            # (kh, kw, ci, co)
    w2 = jnp.zeros((2, 2, 2, 2, Cin, Cout), w_oihw.dtype)   # (a, b, ph, pw, ci, co)
    for a in range(2):
        for ph in range(2):
            kh = 2 * a + ph
            if kh >= K:
                continue
            for bb in range(2):
                for pw in range(2):
                    kw = 2 * bb + pw
                    if kw >= K:
                        continue
                    w2 = w2.at[a, bb, ph, pw].set(w_khwc[kh, kw])
    wf = w2.reshape(2, 2 * 4 * Cin, Cout).astype(dtype)
    b2 = b.reshape(1, Cout).astype(jnp.float32)
    return wf, b2


def fold_up_weight(wt_iohw, b, dtype=MXU_DTYPE):
    """ConvTranspose2d(64,64,4,s=2,p=1) -> dense 3x3 conv over the pad-1 input
    producing 4 output phases.  Contraction depth zero-padded 192 -> 256.

    Returns wf (3, 4*Cin, 4*Cout) with row order (kw, ci) (+ zero rows), and
    bias (1, 4*Cout) f32 in (ph, pw, co) order."""
    Cin, Cout, Kt, _ = wt_iohw.shape                         # (64, 64, 4, 4)
    wbig = jnp.zeros((3, 3, Cin, 2, 2, Cout), wt_iohw.dtype)
    for ph in range(2):
        for a in range(2):
            r = ph + a
            kh = 3 - ph - 2 * a
            for pw in range(2):
                for bb in range(2):
                    c = pw + bb
                    kw = 3 - pw - 2 * bb
                    wbig = wbig.at[r, c, :, ph, pw, :].set(wt_iohw[:, :, kh, kw])
    wbig = wbig.reshape(3, 3 * Cin, 4 * Cout)
    wbig = jnp.pad(wbig, ((0, 0), (0, Cin), (0, 0))).astype(dtype)  # 192 -> 256
    b4 = jnp.tile(b, 4).reshape(1, 4 * Cout).astype(jnp.float32)
    return wbig, b4


# ---------------------------------------------------------------------------
# down=True kernel: stride-2 conv as a 2x2 conv over space-to-depth input.
# Batch folded into M; NCHW output emitted directly from the kernel.
# ---------------------------------------------------------------------------
def _down_kernel(x_ref, w_ref, b_ref, o_ref, *, th, wo, n_img):
    r = pl.program_id(0)
    row0 = pl.multiple_of(r * th, th)
    ci4 = x_ref.shape[-1]                         # 4*Cin = 256
    co = w_ref.shape[-1]                          # 64
    m1 = th * wo                                  # rows per image
    # Accumulator initialized from the bias (bias added exactly once).
    acc = jnp.broadcast_to(b_ref[...], (n_img * m1, co)).astype(jnp.float32)
    for kh in range(2):                           # 2 MXU dots of depth 512
        parts = []
        for n in range(n_img):
            slab = x_ref[n, pl.ds(row0 + kh, th), :, :]       # (th, W2, 4*Cin)
            p = jnp.concatenate(
                [slab[:, kw:kw + wo, :] for kw in range(2)], axis=-1)
            parts.append(p.reshape(m1, 2 * ci4))
        lhs = jnp.concatenate(parts, axis=0)                   # (N*th*wo, 512)
        acc = acc + jnp.dot(lhs, w_ref[kh], preferred_element_type=jnp.float32)
    # Emit NCHW directly: per-image (Co, th*wo) slab, no wrapper transpose.
    for n in range(n_img):
        o_ref[n, :, :] = acc[n * m1:(n + 1) * m1, :].T.astype(o_ref.dtype)


def rescale_down(x_nchw, wf, b2):
    N, Cin, H, W = x_nchw.shape
    Co = wf.shape[-1]
    Hp = H + 2 + (H % 2)
    Wp = W + 2 + (W % 2)
    H2, W2 = Hp // 2, Wp // 2
    Ho, Wo = H2 - 1, W2 - 1

    # pad(1) + space-to-depth(2) + channels-last + bf16 cast: one fused pass.
    xp = jnp.pad(x_nchw, ((0, 0), (0, 0), (1, Hp - H - 1), (1, Wp - W - 1)))
    xs = xp.reshape(N, Cin, H2, 2, W2, 2).transpose(0, 2, 4, 3, 5, 1)
    xs = xs.reshape(N, H2, W2, 4 * Cin).astype(MXU_DTYPE)     # (ph, pw, ci) order

    TH = 8 if (Ho % 8 == 0) else Ho
    n_rb = Ho // TH

    kernel = functools.partial(_down_kernel, th=TH, wo=Wo, n_img=N)
    out = pl.pallas_call(
        kernel,
        out_shape=jax.ShapeDtypeStruct((N, Co, Ho * Wo), jnp.float32),
        grid=(n_rb,),
        in_specs=[
            # tiny full image stays resident (halo rows read from it)
            pl.BlockSpec(xs.shape, lambda r: (0, 0, 0, 0)),
            pl.BlockSpec(wf.shape, lambda r: (0, 0, 0)),
            pl.BlockSpec(b2.shape, lambda r: (0, 0)),
        ],
        out_specs=pl.BlockSpec((N, Co, TH * Wo), lambda r: (0, 0, r)),
        compiler_params=pltpu.CompilerParams(
            dimension_semantics=("parallel",)),
    )(xs, wf, b2)
    return out.reshape(N, Co, Ho, Wo)             # trailing-dim split: free


# ---------------------------------------------------------------------------
# down=False kernel: ConvTranspose2d as a 3x3 conv producing 4 output phases.
# Output VMEM block used as accumulator; Co=256 split into two 128-lane dots.
# ---------------------------------------------------------------------------
def _up_kernel(x_ref, w_ref, b_ref, o_ref, *, th, wo, cin):
    r = pl.program_id(1)
    row0 = pl.multiple_of(r * th, th)
    m = th * wo
    co4 = o_ref.shape[-1]                         # 4*Cout = 256
    half = co4 // 2                               # 128
    # bias added exactly once; o_ref (VMEM) is the accumulator.
    o_ref[0] = jnp.broadcast_to(b_ref[...], (m, co4)).astype(o_ref.dtype)
    zpad = jnp.zeros((th, wo, cin), x_ref.dtype)  # depth pad 192 -> 256 (hoisted)
    for kh in range(3):
        slab = x_ref[0, pl.ds(row0 + kh, th), :, :]           # (th, Wp, Cin)
        lhs = jnp.concatenate(
            [slab[:, kw:kw + wo, :] for kw in range(3)] + [zpad], axis=-1
        ).reshape(m, 4 * cin)                                  # (m, 256)
        for h in range(2):                                     # 128-lane halves
            o_ref[0, :, h * half:(h + 1) * half] += jnp.dot(
                lhs, w_ref[kh, :, h * half:(h + 1) * half],
                preferred_element_type=jnp.float32)


def rescale_up(x_nchw, wf, b4):
    N, Cin, H, W = x_nchw.shape
    Co = wf.shape[-1] // 4
    Hp, Wp = H + 2, W + 2

    # NHWC + pad(1) + bf16 cast: one fused pass.
    x = jnp.transpose(x_nchw, (0, 2, 3, 1))
    xp = jnp.pad(x, ((0, 0), (1, 1), (1, 1), (0, 0))).astype(MXU_DTYPE)

    TH = 8 if (H % 8 == 0) else H
    n_rb = H // TH

    kernel = functools.partial(_up_kernel, th=TH, wo=W, cin=Cin)
    out = pl.pallas_call(
        kernel,
        out_shape=jax.ShapeDtypeStruct((N, H * W, 4 * Co), jnp.float32),
        grid=(N, n_rb),
        in_specs=[
            pl.BlockSpec((1, Hp, Wp, Cin), lambda n, r: (n, 0, 0, 0)),
            pl.BlockSpec(wf.shape, lambda n, r: (0, 0, 0)),
            pl.BlockSpec(b4.shape, lambda n, r: (0, 0)),
        ],
        # natural lane-dense accumulator layout: no per-step retile at store
        out_specs=pl.BlockSpec((1, TH * W, 4 * Co), lambda n, r: (n, r, 0)),
        compiler_params=pltpu.CompilerParams(
            dimension_semantics=("parallel", "parallel")),
    )(xp, wf, b4)

    # depth-to-space + NHWC->NCHW as ONE fused transpose pass.
    y = out.reshape(N, H, W, 2, 2, Co).transpose(0, 5, 1, 3, 2, 4)
    return y.reshape(N, Co, 2 * H, 2 * W)


# ---------------------------------------------------------------------------
# Module-equivalent wrapper (NCHW in, NCHW out).
# ---------------------------------------------------------------------------
class Rescale:
    """Pallas/TPU port of the PyTorch Rescale module."""

    def __init__(self, params, down=True):
        self.down = down
        # Folded weights precomputed once (review item: no per-call refolding).
        if down:
            self.w, self.b = fold_down_weight(params["conv_w"], params["conv_b"])
        else:
            self.w, self.b = fold_up_weight(params["deconv_w"], params["deconv_b"])

    def __call__(self, x_nchw):
        if self.down:
            return rescale_down(x_nchw, self.w, self.b)
        return rescale_up(x_nchw, self.w, self.b)


def init_params(key):
    k1, k2, k3, k4 = jax.random.split(key, 4)
    return {
        # nn.Conv2d(64, 64, 3, stride=2, padding=1): weight (O, I, kH, kW)
        "conv_w": jax.random.normal(k1, (64, 64, 3, 3), jnp.float32) * 0.05,
        "conv_b": jax.random.normal(k2, (64,), jnp.float32) * 0.01,
        # nn.ConvTranspose2d(64, 64, 4, stride=2, padding=1): weight (I, O, kH, kW)
        "deconv_w": jax.random.normal(k3, (64, 64, 4, 4), jnp.float32) * 0.05,
        "deconv_b": jax.random.normal(k4, (64,), jnp.float32) * 0.01,
    }


# ----------------------- plain-XLA references (checks) ----------------------
def _ref_down(x, w, b):
    y = lax.conv_general_dilated(
        x, w, window_strides=(2, 2), padding=((1, 1), (1, 1)),
        dimension_numbers=("NCHW", "OIHW", "NCHW"),
        precision=lax.Precision.HIGHEST)
    return y + b[None, :, None, None]


def _ref_up(x, wt, b):
    w_eq = jnp.transpose(wt, (1, 0, 2, 3))[:, :, ::-1, ::-1]  # (O, I, kH, kW)
    y = lax.conv_general_dilated(
        x, w_eq, window_strides=(1, 1), padding=((2, 2), (2, 2)),
        lhs_dilation=(2, 2),
        dimension_numbers=("NCHW", "OIHW", "NCHW"),
        precision=lax.Precision.HIGHEST)
    return y + b[None, :, None, None]


if __name__ == "__main__":
    key = jax.random.PRNGKey(0)
    pkey, xkey = jax.random.split(key)
    params = init_params(pkey)

    # PyTorch-style NCHW input; the module fixes 64 input channels.
    x = jax.random.normal(xkey, (2, 64, 16, 16), jnp.float32)

    down = jax.jit(Rescale(params, down=True))
    up = jax.jit(Rescale(params, down=False))

    y_down = jax.block_until_ready(down(x))
    y_up = jax.block_until_ready(up(x))

    assert y_down.shape == (2, 64, 8, 8), y_down.shape
    assert y_up.shape == (2, 64, 32, 32), y_up.shape
    assert bool(jnp.all(jnp.isfinite(y_down))) and bool(jnp.all(jnp.isfinite(y_up)))

    r_down = _ref_down(x, params["conv_w"], params["conv_b"])
    r_up = _ref_up(x, params["deconv_w"], params["deconv_b"])
    err_d = float(jnp.max(jnp.abs(y_down - r_down)))
    err_u = float(jnp.max(jnp.abs(y_up - r_up)))
    tol = 5e-2 if MXU_DTYPE == jnp.bfloat16 else 1e-3   # bf16 MXU operands
    assert err_d < tol, f"down-path mismatch: max abs err {err_d}"
    assert err_u < tol, f"up-path mismatch: max abs err {err_u}"

    print("KERNEL_OK")
</pallas_src>

<mosaic_0001>
module attributes {stable_mosaic.version = 11 : i64} {
  func.func @_down_kernel(%arg0: i32, %arg1: memref<2x9x9x256xbf16, #tpu.memory_space<vmem>>, %arg2: memref<2x512x64xbf16, #tpu.memory_space<vmem>>, %arg3: memref<1x64xf32, #tpu.memory_space<vmem>>, %arg4: memref<2x64x64xf32, #tpu.memory_space<vmem>>) attributes {dimension_semantics = [#tpu.dimension_semantics<parallel>], iteration_bounds = array<i64: 1>, scalar_prefetch = 0 : i64, scratch_operands = 0 : i64, tpu.core_type = #tpu.core_type<tc>, window_params = [{pipeline_mode = #tpu.pipeline_mode<synchronous>, transform_indices = @transform_0, window_bounds = array<i64: 2, 9, 9, 256>}, {pipeline_mode = #tpu.pipeline_mode<synchronous>, transform_indices = @transform_1, window_bounds = array<i64: 2, 512, 64>}, {pipeline_mode = #tpu.pipeline_mode<synchronous>, transform_indices = @transform_2, window_bounds = array<i64: 1, 64>}, {transform_indices = @transform_3, window_bounds = array<i64: 2, 64, 64>}]} {
    %c8_i32 = arith.constant 8 : i32
    %0 = arith.muli %arg0, %c8_i32 : i32
    %1 = tpu.assume_multiple %0, 8 : i32
    %c0 = arith.constant 0 : index
    %c0_0 = arith.constant 0 : index
    %2 = vector.load %arg3[%c0, %c0_0] : memref<1x64xf32, #tpu.memory_space<vmem>>, vector<1x64xf32>
    %3 = vector.shape_cast %2 : vector<1x64xf32> to vector<1x64xf32>
    %4 = vector.broadcast %3 : vector<1x64xf32> to vector<128x64xf32>
    %c0_i32 = arith.constant 0 : i32
    %5 = arith.addi %1, %c0_i32 : i32
    %c0_1 = arith.constant 0 : index
    %6 = arith.index_cast %5 : i32 to index
    %c0_2 = arith.constant 0 : index
    %c0_3 = arith.constant 0 : index
    %7 = vector.load %arg1[%c0_1, %6, %c0_2, %c0_3] : memref<2x9x9x256xbf16, #tpu.memory_space<vmem>>, vector<1x8x9x256xbf16>
    %8 = vector.shape_cast %7 : vector<1x8x9x256xbf16> to vector<8x9x256xbf16>
    %9 = vector.extract_strided_slice %8 {offsets = [0, 0, 0], sizes = [8, 8, 256], strides = [1, 1, 1]} : vector<8x9x256xbf16> to vector<8x8x256xbf16>
    %10 = vector.extract_strided_slice %8 {offsets = [0, 1, 0], sizes = [8, 8, 256], strides = [1, 1, 1]} : vector<8x9x256xbf16> to vector<8x8x256xbf16>
    %11 = tpu.concatenate %9, %10 in 2 : vector<8x8x256xbf16>, vector<8x8x256xbf16> -> vector<8x8x512xbf16>
    %12 = vector.shape_cast %11 : vector<8x8x512xbf16> to vector<64x512xbf16>
    %c0_i32_4 = arith.constant 0 : i32
    %13 = arith.addi %1, %c0_i32_4 : i32
    %c1 = arith.constant 1 : index
    %14 = arith.index_cast %13 : i32 to index
    %c0_5 = arith.constant 0 : index
    %c0_6 = arith.constant 0 : index
    %15 = vector.load %arg1[%c1, %14, %c0_5, %c0_6] : memref<2x9x9x256xbf16, #tpu.memory_space<vmem>>, vector<1x8x9x256xbf16>
    %16 = vector.shape_cast %15 : vector<1x8x9x256xbf16> to vector<8x9x256xbf16>
    %17 = vector.extract_strided_slice %16 {offsets = [0, 0, 0], sizes = [8, 8, 256], strides = [1, 1, 1]} : vector<8x9x256xbf16> to vector<8x8x256xbf16>
    %18 = vector.extract_strided_slice %16 {offsets = [0, 1, 0], sizes = [8, 8, 256], strides = [1, 1, 1]} : vector<8x9x256xbf16> to vector<8x8x256xbf16>
    %19 = tpu.concatenate %17, %18 in 2 : vector<8x8x256xbf16>, vector<8x8x256xbf16> -> vector<8x8x512xbf16>
    %20 = vector.shape_cast %19 : vector<8x8x512xbf16> to vector<64x512xbf16>
    %21 = tpu.concatenate %12, %20 in 0 : vector<64x512xbf16>, vector<64x512xbf16> -> vector<128x512xbf16>
    %c0_7 = arith.constant 0 : index
    %c0_8 = arith.constant 0 : index
    %c0_9 = arith.constant 0 : index
    %22 = vector.load %arg2[%c0_7, %c0_8, %c0_9] : memref<2x512x64xbf16, #tpu.memory_space<vmem>>, vector<1x512x64xbf16>
    %23 = vector.shape_cast %22 : vector<1x512x64xbf16> to vector<512x64xbf16>
    %cst = arith.constant dense<0.000000e+00> : vector<128x64xf32>
    %24 = tpu.matmul %21, %23, %cst {dimension_numbers = #tpu.dot_dimension_numbers<[1], [0], [0], [1], [0, 0, 1, 1], [], []>} : vector<128x512xbf16>, vector<512x64xbf16>, vector<128x64xf32> -> vector<128x64xf32>
    %25 = arith.addf %4, %24 : vector<128x64xf32>
    %c1_i32 = arith.constant 1 : i32
    %26 = arith.addi %1, %c1_i32 : i32
    %c0_10 = arith.constant 0 : index
    %27 = arith.index_cast %26 : i32 to index
    %c0_11 = arith.constant 0 : index
    %c0_12 = arith.constant 0 : index
    %28 = vector.load %arg1[%c0_10, %27, %c0_11, %c0_12] : memref<2x9x9x256xbf16, #tpu.memory_space<vmem>>, vector<1x8x9x256xbf16>
    %29 = vector.shape_cast %28 : vector<1x8x9x256xbf16> to vector<8x9x256xbf16>
    %30 = vector.extract_strided_slice %29 {offsets = [0, 0, 0], sizes = [8, 8, 256], strides = [1, 1, 1]} : vector<8x9x256xbf16> to vector<8x8x256xbf16>
    %31 = vector.extract_strided_slice %29 {offsets = [0, 1, 0], sizes = [8, 8, 256], strides = [1, 1, 1]} : vector<8x9x256xbf16> to vector<8x8x256xbf16>
    %32 = tpu.concatenate %30, %31 in 2 : vector<8x8x256xbf16>, vector<8x8x256xbf16> -> vector<8x8x512xbf16>
    %33 = vector.shape_cast %32 : vector<8x8x512xbf16> to vector<64x512xbf16>
    %c1_i32_13 = arith.constant 1 : i32
    %34 = arith.addi %1, %c1_i32_13 : i32
    %c1_14 = arith.constant 1 : index
    %35 = arith.index_cast %34 : i32 to index
    %c0_15 = arith.constant 0 : index
    %c0_16 = arith.constant 0 : index
    %36 = vector.load %arg1[%c1_14, %35, %c0_15, %c0_16] : memref<2x9x9x256xbf16, #tpu.memory_space<vmem>>, vector<1x8x9x256xbf16>
    %37 = vector.shape_cast %36 : vector<1x8x9x256xbf16> to vector<8x9x256xbf16>
    %38 = vector.extract_strided_slice %37 {offsets = [0, 0, 0], sizes = [8, 8, 256], strides = [1, 1, 1]} : vector<8x9x256xbf16> to vector<8x8x256xbf16>
    %39 = vector.extract_strided_slice %37 {offsets = [0, 1, 0], sizes = [8, 8, 256], strides = [1, 1, 1]} : vector<8x9x256xbf16> to vector<8x8x256xbf16>
    %40 = tpu.concatenate %38, %39 in 2 : vector<8x8x256xbf16>, vector<8x8x256xbf16> -> vector<8x8x512xbf16>
    %41 = vector.shape_cast %40 : vector<8x8x512xbf16> to vector<64x512xbf16>
    %42 = tpu.concatenate %33, %41 in 0 : vector<64x512xbf16>, vector<64x512xbf16> -> vector<128x512xbf16>
    %c1_17 = arith.constant 1 : index
    %c0_18 = arith.constant 0 : index
    %c0_19 = arith.constant 0 : index
    %43 = vector.load %arg2[%c1_17, %c0_18, %c0_19] : memref<2x512x64xbf16, #tpu.memory_space<vmem>>, vector<1x512x64xbf16>
    %44 = vector.shape_cast %43 : vector<1x512x64xbf16> to vector<512x64xbf16>
    %cst_20 = arith.constant dense<0.000000e+00> : vector<128x64xf32>
    %45 = tpu.matmul %42, %44, %cst_20 {dimension_numbers = #tpu.dot_dimension_numbers<[1], [0], [0], [1], [0, 0, 1, 1], [], []>} : vector<128x512xbf16>, vector<512x64xbf16>, vector<128x64xf32> -> vector<128x64xf32>
    %46 = arith.addf %25, %45 : vector<128x64xf32>
    %47 = vector.extract_strided_slice %46 {offsets = [0, 0], sizes = [64, 64], strides = [1, 1]} : vector<128x64xf32> to vector<64x64xf32>
    %48 = tpu.transpose %47, [1, 0] : vector<64x64xf32> -> vector<64x64xf32>
    %c0_21 = arith.constant 0 : index
    %c0_22 = arith.constant 0 : index
    %c0_23 = arith.constant 0 : index
    %49 = vector.load %arg4[%c0_21, %c0_22, %c0_23] : memref<2x64x64xf32, #tpu.memory_space<vmem>>, vector<1x64x64xf32>
    %50 = vector.shape_cast %49 : vector<1x64x64xf32> to vector<64x64xf32>
    %51 = vector.shape_cast %48 : vector<64x64xf32> to vector<1x64x64xf32>
    tpu.vector_store %arg4[%c0_21, %c0_22, %c0_23], %51 {strides = array<i32>} : memref<2x64x64xf32, #tpu.memory_space<vmem>>, vector<1x64x64xf32>,
    %52 = vector.extract_strided_slice %46 {offsets = [64, 0], sizes = [64, 64], strides = [1, 1]} : vector<128x64xf32> to vector<64x64xf32>
    %53 = tpu.transpose %52, [1, 0] : vector<64x64xf32> -> vector<64x64xf32>
    %c1_24 = arith.constant 1 : index
    %c0_25 = arith.constant 0 : index
    %c0_26 = arith.constant 0 : index
    %54 = vector.load %arg4[%c1_24, %c0_25, %c0_26] : memref<2x64x64xf32, #tpu.memory_space<vmem>>, vector<1x64x64xf32>
    %55 = vector.shape_cast %54 : vector<1x64x64xf32> to vector<64x64xf32>
    %56 = vector.shape_cast %53 : vector<64x64xf32> to vector<1x64x64xf32>
    tpu.vector_store %arg4[%c1_24, %c0_25, %c0_26], %56 {strides = array<i32>} : memref<2x64x64xf32, #tpu.memory_space<vmem>>, vector<1x64x64xf32>,
    return
  }
  func.func @transform_0(%arg0: i32) -> (i32, i32, i32, i32) {
    %c0_i32 = arith.constant 0 : i32
    %c0_i32_0 = arith.constant 0 : i32
    %c0_i32_1 = arith.constant 0 : i32
    %c0_i32_2 = arith.constant 0 : i32
    %c0_i32_3 = arith.constant 0 : i32
    return %c0_i32, %c0_i32_0, %c0_i32_1, %c0_i32_2 : i32, i32, i32, i32
  }
  func.func @transform_1(%arg0: i32) -> (i32, i32, i32) {
    %c0_i32 = arith.constant 0 : i32
    %c0_i32_0 = arith.constant 0 : i32
    %c0_i32_1 = arith.constant 0 : i32
    %c0_i32_2 = arith.constant 0 : i32
    return %c0_i32, %c0_i32_0, %c0_i32_1 : i32, i32, i32
  }
  func.func @transform_2(%arg0: i32) -> (i32, i32) {
    %c0_i32 = arith.constant 0 : i32
    %c0_i32_0 = arith.constant 0 : i32
    %c0_i32_1 = arith.constant 0 : i32
    return %c0_i32, %c0_i32_0 : i32, i32
  }
  func.func @transform_3(%arg0: i32) -> (i32, i32, i32) {
    %c0_i32 = arith.constant 0 : i32
    %c0_i32_0 = arith.constant 0 : i32
    %c0_i32_1 = arith.constant 0 : i32
    return %c0_i32, %c0_i32_0, %arg0 : i32, i32, i32
  }
}

</mosaic_0001>

<llo_original>
// kernel: _unnamed_function_.1
$region0: #{_unnamed_function_.1}
  #allocation0 [shape = 'u32[]', space=smem, size = 0x4, offset = 0x4, fixed_abs, tag = 'smem constant byte address 0x4 - core index']
  #allocation1 [shape = 'u32[144,128]{1,0:T(1,128)}', space=vmem, size = 0x12000, scoped, tag = 'internal scratch']
  %s0 = inlined_call_operand.vmem [shape: bf16[2,9,9,256], index: 0, kind: input, shape index: {}]
  %s1 = inlined_call_operand.vmem [shape: bf16[2,512,64], index: 1, kind: input, shape index: {}]
  %s2 = inlined_call_operand.vmem [shape: f32[1,64], index: 2, kind: input, shape index: {}]
  %s3 = inlined_call_operand.vmem [shape: f32[2,64,64], index: 3, kind: output, shape index: {}]
  %s4 = sld [smem:[#allocation0]]
  $region22: #{_unnamed_function_.1} parent=0
    _
  %s6 = ssub.s32 1, %s4
  %s7 = scalar_select 0, %s6, %s4
  // Predicated region
  $region2: #{_unnamed_function_.1} parent=0 // pred_check
    _
  $region3: #{_unnamed_function_.1} parent=0 // pred_check_branch
    %9 = sbr.rel (0) target = $region5
  $region4: #{_unnamed_function_.1} parent=0 // pred_region
    _
  $region5: #{_unnamed_function_.1} parent=0 // pred_fallthru
    _
  // Predicated region
  $region6: #{_unnamed_function_.1} parent=0 // pred_check
    _
  $region7: #{_unnamed_function_.1} parent=0 // pred_check_branch
    %11 = sbr.rel (0) target = $region9
  $region8: #{_unnamed_function_.1} parent=0 // pred_region
    _
  $region9: #{_unnamed_function_.1} parent=0 // pred_fallthru
    _
  // Predicated region
  $region10: #{_unnamed_function_.1} parent=0 // pred_check
    _
  $region11: #{_unnamed_function_.1} parent=0 // pred_check_branch
    %13 = sbr.rel (0) target = $region13
  $region12: #{_unnamed_function_.1} parent=0 // pred_region
    _
  $region13: #{_unnamed_function_.1} parent=0 // pred_fallthru
    _
  %s15 = smul.u32 0, 8
  %v16 = vld [vmem:[%s2] sm:$0x1]
  %v18 = vlaneseq
  %v19 = vshrl.u32 %v18, 7
  %v20 = vsub.s32 0, %v19
  %v21 = vrot.slane %v16, %v20
  %s23 = smul.u32 %s15, 4
  %s24 = smul.addr %s23, 4
  %s25 = scalar_lea.vmem %s0, %s24
  %v26 = vld [vmem:[%s25] sm:$0xff]
  %v27 = vld [vmem:[%s25 + $0x8] sm:$0x11]
  %v28 = vld [vmem:[%s25 + $0x10] sm:$0xff]
  %v29 = vld [vmem:[%s25 + $0x18] sm:$0x11]
  %v30 = vld [vmem:[%s25 + $0x20] sm:$0xff]
  %v31 = vld [vmem:[%s25 + $0x28] sm:$0x11]
  %v32 = vld [vmem:[%s25 + $0x30] sm:$0xff]
  %v33 = vld [vmem:[%s25 + $0x38] sm:$0x11]
  %v34 = vld [vmem:[%s25 + $0x40] sm:$0xff]
  %v35 = vld [vmem:[%s25 + $0x48] sm:$0x11]
  %v36 = vld [vmem:[%s25 + $0x50] sm:$0xff]
  %v37 = vld [vmem:[%s25 + $0x58] sm:$0x11]
  %v38 = vld [vmem:[%s25 + $0x60] sm:$0xff]
  %v39 = vld [vmem:[%s25 + $0x68] sm:$0x11]
  %v40 = vld [vmem:[%s25 + $0x70] sm:$0xff]
  %v41 = vld [vmem:[%s25 + $0x78] sm:$0x11]
  %v50 = vunpack.c.l.b16 %v26
  %v51 = vunpack.c.h.b16 %v26
  %v52 = vunpack.c.l.b16 %v28
  %v53 = vunpack.c.h.b16 %v28
  %v54 = vunpack.c.l.b16 %v30
  %v55 = vunpack.c.h.b16 %v30
  %v56 = vunpack.c.l.b16 %v32
  %v57 = vunpack.c.h.b16 %v32
  %v58 = vunpack.c.l.b16 %v34
  %v59 = vunpack.c.h.b16 %v34
  %v60 = vunpack.c.l.b16 %v36
  %v61 = vunpack.c.h.b16 %v36
  %v62 = vunpack.c.l.b16 %v38
  %v63 = vunpack.c.h.b16 %v38
  %v64 = vunpack.c.l.b16 %v40
  %v65 = vunpack.c.h.b16 %v40
  %v74 = vunpack.c.l.b16 %v27
  %v75 = vunpack.c.h.b16 %v27
  %v76 = vunpack.c.l.b16 %v29
  %v77 = vunpack.c.h.b16 %v29
  %v78 = vunpack.c.l.b16 %v31
  %v79 = vunpack.c.h.b16 %v31
  %v80 = vunpack.c.l.b16 %v33
  %v81 = vunpack.c.h.b16 %v33
  %v82 = vunpack.c.l.b16 %v35
  %v83 = vunpack.c.h.b16 %v35
  %v84 = vunpack.c.l.b16 %v37
  %v85 = vunpack.c.h.b16 %v37
  %v86 = vunpack.c.l.b16 %v39
  %v87 = vunpack.c.h.b16 %v39
  %v88 = vunpack.c.l.b16 %v41
  %v89 = vunpack.c.h.b16 %v41
  %v90 = vpack.c.b16 %v74, %v50
  %v91 = vpack.c.b16 %v75, %v51
  %v92 = vpack.c.b16 %v76, %v52
  %v93 = vpack.c.b16 %v77, %v53
  %v94 = vpack.c.b16 %v78, %v54
  %v95 = vpack.c.b16 %v79, %v55
  %v96 = vpack.c.b16 %v80, %v56
  %v97 = vpack.c.b16 %v81, %v57
  %v98 = vpack.c.b16 %v82, %v58
  %v99 = vpack.c.b16 %v83, %v59
  %v100 = vpack.c.b16 %v84, %v60
  %v101 = vpack.c.b16 %v85, %v61
  %v102 = vpack.c.b16 %v86, %v62
  %v103 = vpack.c.b16 %v87, %v63
  %v104 = vpack.c.b16 %v88, %v64
  %v105 = vpack.c.b16 %v89, %v65
  %v107 = vshrl.u32 %v90, 16
  %v109 = vshll.u32 %v90, 16
  %v111 = vrot.slane %v109, 1
  %v112 = vor.u32 %v107, %v111
  %v114 = vshrl.u32 %v91, 16
  %v116 = vshll.u32 %v91, 16
  %v118 = vrot.slane %v116, 1
  %v119 = vor.u32 %v114, %v118
  %v121 = vshrl.u32 %v92, 16
  %v123 = vshll.u32 %v92, 16
  %v125 = vrot.slane %v123, 1
  %v126 = vor.u32 %v121, %v125
  %v128 = vshrl.u32 %v93, 16
  %v130 = vshll.u32 %v93, 16
  %v132 = vrot.slane %v130, 1
  %v133 = vor.u32 %v128, %v132
  %v135 = vshrl.u32 %v94, 16
  %v137 = vshll.u32 %v94, 16
  %v139 = vrot.slane %v137, 1
  %v140 = vor.u32 %v135, %v139
  %v142 = vshrl.u32 %v95, 16
  %v144 = vshll.u32 %v95, 16
  %v146 = vrot.slane %v144, 1
  %v147 = vor.u32 %v142, %v146
  %v149 = vshrl.u32 %v96, 16
  %v151 = vshll.u32 %v96, 16
  %v153 = vrot.slane %v151, 1
  %v154 = vor.u32 %v149, %v153
  %v156 = vshrl.u32 %v97, 16
  %v158 = vshll.u32 %v97, 16
  %v160 = vrot.slane %v158, 1
  %v161 = vor.u32 %v156, %v160
  %v163 = vshrl.u32 %v98, 16
  %v165 = vshll.u32 %v98, 16
  %v167 = vrot.slane %v165, 1
  %v168 = vor.u32 %v163, %v167
  %v170 = vshrl.u32 %v99, 16
  %v172 = vshll.u32 %v99, 16
  %v174 = vrot.slane %v172, 1
  %v175 = vor.u32 %v170, %v174
  %v177 = vshrl.u32 %v100, 16
  %v179 = vshll.u32 %v100, 16
  %v181 = vrot.slane %v179, 1
  %v182 = vor.u32 %v177, %v181
  %v184 = vshrl.u32 %v101, 16
  %v186 = vshll.u32 %v101, 16
  %v188 = vrot.slane %v186, 1
  %v189 = vor.u32 %v184, %v188
  %v191 = vshrl.u32 %v102, 16
  %v193 = vshll.u32 %v102, 16
  %v195 = vrot.slane %v193, 1
  %v196 = vor.u32 %v191, %v195
  %v198 = vshrl.u32 %v103, 16
  %v200 = vshll.u32 %v103, 16
  %v202 = vrot.slane %v200, 1
  %v203 = vor.u32 %v198, %v202
  %v205 = vshrl.u32 %v104, 16
  %v207 = vshll.u32 %v104, 16
  %v209 = vrot.slane %v207, 1
  %v210 = vor.u32 %v205, %v209
  %v212 = vshrl.u32 %v105, 16
  %v214 = vshll.u32 %v105, 16
  %v216 = vrot.slane %v214, 1
  %v217 = vor.u32 %v212, %v216
  %v218 = vunpack.c.l.b16 %v112
  %v219 = vunpack.c.l.b16 %v119
  %v220 = vunpack.c.l.b16 %v126
  %v221 = vunpack.c.l.b16 %v133
  %v222 = vunpack.c.l.b16 %v140
  %v223 = vunpack.c.l.b16 %v147
  %v224 = vunpack.c.l.b16 %v154
  %v225 = vunpack.c.l.b16 %v161
  %v226 = vunpack.c.l.b16 %v168
  %v227 = vunpack.c.l.b16 %v175
  %v228 = vunpack.c.l.b16 %v182
  %v229 = vunpack.c.l.b16 %v189
  %v230 = vunpack.c.l.b16 %v196
  %v231 = vunpack.c.l.b16 %v203
  %v232 = vunpack.c.l.b16 %v210
  %v233 = vunpack.c.l.b16 %v217
  %s234 = sadd.s32 %s23, 36
  %s235 = smul.addr %s234, 4
  %s236 = scalar_lea.vmem %s0, %s235
  %v237 = vld [vmem:[%s236] sm:$0xff]
  %v238 = vld [vmem:[%s236 + $0x8] sm:$0x11]
  %v239 = vld [vmem:[%s236 + $0x10] sm:$0xff]
  %v240 = vld [vmem:[%s236 + $0x18] sm:$0x11]
  %v241 = vld [vmem:[%s236 + $0x20] sm:$0xff]
  %v242 = vld [vmem:[%s236 + $0x28] sm:$0x11]
  %v243 = vld [vmem:[%s236 + $0x30] sm:$0xff]
  %v244 = vld [vmem:[%s236 + $0x38] sm:$0x11]
  %v245 = vld [vmem:[%s236 + $0x40] sm:$0xff]
  %v246 = vld [vmem:[%s236 + $0x48] sm:$0x11]
  %v247 = vld [vmem:[%s236 + $0x50] sm:$0xff]
  %v248 = vld [vmem:[%s236 + $0x58] sm:$0x11]
  %v249 = vld [vmem:[%s236 + $0x60] sm:$0xff]
  %v250 = vld [vmem:[%s236 + $0x68] sm:$0x11]
  %v251 = vld [vmem:[%s236 + $0x70] sm:$0xff]
  %v252 = vld [vmem:[%s236 + $0x78] sm:$0x11]
  %v261 = vunpack.c.l.b16 %v237
  %v262 = vunpack.c.h.b16 %v237
  %v263 = vunpack.c.l.b16 %v239
  %v264 = vunpack.c.h.b16 %v239
  %v265 = vunpack.c.l.b16 %v241
  %v266 = vunpack.c.h.b16 %v241
  %v267 = vunpack.c.l.b16 %v243
  %v268 = vunpack.c.h.b16 %v243
  %v269 = vunpack.c.l.b16 %v245
  %v270 = vunpack.c.h.b16 %v245
  %v271 = vunpack.c.l.b16 %v247
  %v272 = vunpack.c.h.b16 %v247
  %v273 = vunpack.c.l.b16 %v249
  %v274 = vunpack.c.h.b16 %v249
  %v275 = vunpack.c.l.b16 %v251
  %v276 = vunpack.c.h.b16 %v251
  %v285 = vunpack.c.l.b16 %v238
  %v286 = vunpack.c.h.b16 %v238
  %v287 = vunpack.c.l.b16 %v240
  %v288 = vunpack.c.h.b16 %v240
  %v289 = vunpack.c.l.b16 %v242
  %v290 = vunpack.c.h.b16 %v242
  %v291 = vunpack.c.l.b16 %v244
  %v292 = vunpack.c.h.b16 %v244
  %v293 = vunpack.c.l.b16 %v246
  %v294 = vunpack.c.h.b16 %v246
  %v295 = vunpack.c.l.b16 %v248
  %v296 = vunpack.c.h.b16 %v248
  %v297 = vunpack.c.l.b16 %v250
  %v298 = vunpack.c.h.b16 %v250
  %v299 = vunpack.c.l.b16 %v252
  %v300 = vunpack.c.h.b16 %v252
  %v301 = vpack.c.b16 %v285, %v261
  %v302 = vpack.c.b16 %v286, %v262
  %v303 = vpack.c.b16 %v287, %v263
  %v304 = vpack.c.b16 %v288, %v264
  %v305 = vpack.c.b16 %v289, %v265
  %v306 = vpack.c.b16 %v290, %v266
  %v307 = vpack.c.b16 %v291, %v267
  %v308 = vpack.c.b16 %v292, %v268
  %v309 = vpack.c.b16 %v293, %v269
  %v310 = vpack.c.b16 %v294, %v270
  %v311 = vpack.c.b16 %v295, %v271
  %v312 = vpack.c.b16 %v296, %v272
  %v313 = vpack.c.b16 %v297, %v273
  %v314 = vpack.c.b16 %v298, %v274
  %v315 = vpack.c.b16 %v299, %v275
  %v316 = vpack.c.b16 %v300, %v276
  %v318 = vshrl.u32 %v301, 16
  %v320 = vshll.u32 %v301, 16
  %v322 = vrot.slane %v320, 1
  %v323 = vor.u32 %v318, %v322
  %v325 = vshrl.u32 %v302, 16
  %v327 = vshll.u32 %v302, 16
  %v329 = vrot.slane %v327, 1
  %v330 = vor.u32 %v325, %v329
  %v332 = vshrl.u32 %v303, 16
  %v334 = vshll.u32 %v303, 16
  %v336 = vrot.slane %v334, 1
  %v337 = vor.u32 %v332, %v336
  %v339 = vshrl.u32 %v304, 16
  %v341 = vshll.u32 %v304, 16
  %v343 = vrot.slane %v341, 1
  %v344 = vor.u32 %v339, %v343
  %v346 = vshrl.u32 %v305, 16
  %v348 = vshll.u32 %v305, 16
  %v350 = vrot.slane %v348, 1
  %v351 = vor.u32 %v346, %v350
  %v353 = vshrl.u32 %v306, 16
  %v355 = vshll.u32 %v306, 16
  %v357 = vrot.slane %v355, 1
  %v358 = vor.u32 %v353, %v357
  %v360 = vshrl.u32 %v307, 16
  %v362 = vshll.u32 %v307, 16
  %v364 = vrot.slane %v362, 1
  %v365 = vor.u32 %v360, %v364
  %v367 = vshrl.u32 %v308, 16
  %v369 = vshll.u32 %v308, 16
  %v371 = vrot.slane %v369, 1
  %v372 = vor.u32 %v367, %v371
  %v374 = vshrl.u32 %v309, 16
  %v376 = vshll.u32 %v309, 16
  %v378 = vrot.slane %v376, 1
  %v379 = vor.u32 %v374, %v378
  %v381 = vshrl.u32 %v310, 16
  %v383 = vshll.u32 %v310, 16
  %v385 = vrot.slane %v383, 1
  %v386 = vor.u32 %v381, %v385
  %v388 = vshrl.u32 %v311, 16
  %v390 = vshll.u32 %v311, 16
  %v392 = vrot.slane %v390, 1
  %v393 = vor.u32 %v388, %v392
  %v395 = vshrl.u32 %v312, 16
  %v397 = vshll.u32 %v312, 16
  %v399 = vrot.slane %v397, 1
  %v400 = vor.u32 %v395, %v399
  %v402 = vshrl.u32 %v313, 16
  %v404 = vshll.u32 %v313, 16
  %v406 = vrot.slane %v404, 1
  %v407 = vor.u32 %v402, %v406
  %v409 = vshrl.u32 %v314, 16
  %v411 = vshll.u32 %v314, 16
  %v413 = vrot.slane %v411, 1
  %v414 = vor.u32 %v409, %v413
  %v416 = vshrl.u32 %v315, 16
  %v418 = vshll.u32 %v315, 16
  %v420 = vrot.slane %v418, 1
  %v421 = vor.u32 %v416, %v420
  %v423 = vshrl.u32 %v316, 16
  %v425 = vshll.u32 %v316, 16
  %v427 = vrot.slane %v425, 1
  %v428 = vor.u32 %v423, %v427
  %v429 = vunpack.c.l.b16 %v323
  %v430 = vunpack.c.l.b16 %v330
  %v431 = vunpack.c.l.b16 %v337
  %v432 = vunpack.c.l.b16 %v344
  %v433 = vunpack.c.l.b16 %v351
  %v434 = vunpack.c.l.b16 %v358
  %v435 = vunpack.c.l.b16 %v365
  %v436 = vunpack.c.l.b16 %v372
  %v437 = vunpack.c.l.b16 %v379
  %v438 = vunpack.c.l.b16 %v386
  %v439 = vunpack.c.l.b16 %v393
  %v440 = vunpack.c.l.b16 %v400
  %v441 = vunpack.c.l.b16 %v407
  %v442 = vunpack.c.l.b16 %v414
  %v443 = vunpack.c.l.b16 %v421
  %v444 = vunpack.c.l.b16 %v428
  %v445 = vpack.c.b16 %v52, %v50
  %v446 = vpack.c.b16 %v53, %v51
  %v447 = vpack.c.b16 %v220, %v218
  %v448 = vpack.c.b16 %v221, %v219
  %v449 = vpack.c.b16 %v56, %v54
  %v450 = vpack.c.b16 %v57, %v55
  %v451 = vpack.c.b16 %v224, %v222
  %v452 = vpack.c.b16 %v225, %v223
  %v453 = vpack.c.b16 %v60, %v58
  %v454 = vpack.c.b16 %v61, %v59
  %v455 = vpack.c.b16 %v228, %v226
  %v456 = vpack.c.b16 %v229, %v227
  %v457 = vpack.c.b16 %v64, %v62
  %v458 = vpack.c.b16 %v65, %v63
  %v459 = vpack.c.b16 %v232, %v230
  %v460 = vpack.c.b16 %v233, %v231
  %v477 = vpack.c.b16 %v263, %v261
  %v478 = vpack.c.b16 %v264, %v262
  %v479 = vpack.c.b16 %v431, %v429
  %v480 = vpack.c.b16 %v432, %v430
  %v481 = vpack.c.b16 %v267, %v265
  %v482 = vpack.c.b16 %v268, %v266
  %v483 = vpack.c.b16 %v435, %v433
  %v484 = vpack.c.b16 %v436, %v434
  %v485 = vpack.c.b16 %v271, %v269
  %v486 = vpack.c.b16 %v272, %v270
  %v487 = vpack.c.b16 %v439, %v437
  %v488 = vpack.c.b16 %v440, %v438
  %v489 = vpack.c.b16 %v275, %v273
  %v490 = vpack.c.b16 %v276, %v274
  %v491 = vpack.c.b16 %v443, %v441
  %v492 = vpack.c.b16 %v444, %v442
  %v509 = vld [vmem:[%s1] sm:$0xf]
  %v510 = vld [vmem:[%s1 + $0x4] sm:$0xf]
  %v511 = vld [vmem:[%s1 + $0x8] sm:$0xf]
  %v512 = vld [vmem:[%s1 + $0xc] sm:$0xf]
  %v513 = vld [vmem:[%s1 + $0x10] sm:$0xf]
  %v514 = vld [vmem:[%s1 + $0x14] sm:$0xf]
  %v515 = vld [vmem:[%s1 + $0x18] sm:$0xf]
  %v516 = vld [vmem:[%s1 + $0x1c] sm:$0xf]
  %v517 = vld [vmem:[%s1 + $0x20] sm:$0xf]
  %v518 = vld [vmem:[%s1 + $0x24] sm:$0xf]
  %v519 = vld [vmem:[%s1 + $0x28] sm:$0xf]
  %v520 = vld [vmem:[%s1 + $0x2c] sm:$0xf]
  %v521 = vld [vmem:[%s1 + $0x30] sm:$0xf]
  %v522 = vld [vmem:[%s1 + $0x34] sm:$0xf]
  %v523 = vld [vmem:[%s1 + $0x38] sm:$0xf]
  %v524 = vld [vmem:[%s1 + $0x3c] sm:$0xf]
  %v525 = vld [vmem:[%s1 + $0x40] sm:$0xf]
  %v526 = vld [vmem:[%s1 + $0x44] sm:$0xf]
  %v527 = vld [vmem:[%s1 + $0x48] sm:$0xf]
  %v528 = vld [vmem:[%s1 + $0x4c] sm:$0xf]
  %v529 = vld [vmem:[%s1 + $0x50] sm:$0xf]
  %v530 = vld [vmem:[%s1 + $0x54] sm:$0xf]
  %v531 = vld [vmem:[%s1 + $0x58] sm:$0xf]
  %v532 = vld [vmem:[%s1 + $0x5c] sm:$0xf]
  %v533 = vld [vmem:[%s1 + $0x60] sm:$0xf]
  %v534 = vld [vmem:[%s1 + $0x64] sm:$0xf]
  %v535 = vld [vmem:[%s1 + $0x68] sm:$0xf]
  %v536 = vld [vmem:[%s1 + $0x6c] sm:$0xf]
  %v537 = vld [vmem:[%s1 + $0x70] sm:$0xf]
  %v538 = vld [vmem:[%s1 + $0x74] sm:$0xf]
  %v539 = vld [vmem:[%s1 + $0x78] sm:$0xf]
  %v540 = vld [vmem:[%s1 + $0x7c] sm:$0xf]
  %v541 = vld [vmem:[%s1 + $0x80] sm:$0xf]
  %v542 = vld [vmem:[%s1 + $0x84] sm:$0xf]
  %v543 = vld [vmem:[%s1 + $0x88] sm:$0xf]
  %v544 = vld [vmem:[%s1 + $0x8c] sm:$0xf]
  %v545 = vld [vmem:[%s1 + $0x90] sm:$0xf]
  %v546 = vld [vmem:[%s1 + $0x94] sm:$0xf]
  %v547 = vld [vmem:[%s1 + $0x98] sm:$0xf]
  %v548 = vld [vmem:[%s1 + $0x9c] sm:$0xf]
  %v549 = vld [vmem:[%s1 + $0xa0] sm:$0xf]
  %v550 = vld [vmem:[%s1 + $0xa4] sm:$0xf]
  %v551 = vld [vmem:[%s1 + $0xa8] sm:$0xf]
  %v552 = vld [vmem:[%s1 + $0xac] sm:$0xf]
  %v553 = vld [vmem:[%s1 + $0xb0] sm:$0xf]
  %v554 = vld [vmem:[%s1 + $0xb4] sm:$0xf]
  %v555 = vld [vmem:[%s1 + $0xb8] sm:$0xf]
  %v556 = vld [vmem:[%s1 + $0xbc] sm:$0xf]
  %v557 = vld [vmem:[%s1 + $0xc0] sm:$0xf]
  %v558 = vld [vmem:[%s1 + $0xc4] sm:$0xf]
  %v559 = vld [vmem:[%s1 + $0xc8] sm:$0xf]
  %v560 = vld [vmem:[%s1 + $0xcc] sm:$0xf]
  %v561 = vld [vmem:[%s1 + $0xd0] sm:$0xf]
  %v562 = vld [vmem:[%s1 + $0xd4] sm:$0xf]
  %v563 = vld [vmem:[%s1 + $0xd8] sm:$0xf]
  %v564 = vld [vmem:[%s1 + $0xdc] sm:$0xf]
  %v565 = vld [vmem:[%s1 + $0xe0] sm:$0xf]
  %v566 = vld [vmem:[%s1 + $0xe4] sm:$0xf]
  %v567 = vld [vmem:[%s1 + $0xe8] sm:$0xf]
  %v568 = vld [vmem:[%s1 + $0xec] sm:$0xf]
  %v569 = vld [vmem:[%s1 + $0xf0] sm:$0xf]
  %v570 = vld [vmem:[%s1 + $0xf4] sm:$0xf]
  %v571 = vld [vmem:[%s1 + $0xf8] sm:$0xf]
  %v572 = vld [vmem:[%s1 + $0xfc] sm:$0xf]
  %v637 = vunpack.c.l.b16 %v509
  %v638 = vunpack.c.l.b16 %v510
  %v639 = vunpack.c.l.b16 %v511
  %v640 = vunpack.c.l.b16 %v512
  %v641 = vunpack.c.l.b16 %v513
  %v642 = vunpack.c.l.b16 %v514
  %v643 = vunpack.c.l.b16 %v515
  %v644 = vunpack.c.l.b16 %v516
  %v645 = vunpack.c.l.b16 %v517
  %v646 = vunpack.c.l.b16 %v518
  %v647 = vunpack.c.l.b16 %v519
  %v648 = vunpack.c.l.b16 %v520
  %v649 = vunpack.c.l.b16 %v521
  %v650 = vunpack.c.l.b16 %v522
  %v651 = vunpack.c.l.b16 %v523
  %v652 = vunpack.c.l.b16 %v524
  %v653 = vunpack.c.l.b16 %v525
  %v654 = vunpack.c.l.b16 %v526
  %v655 = vunpack.c.l.b16 %v527
  %v656 = vunpack.c.l.b16 %v528
  %v657 = vunpack.c.l.b16 %v529
  %v658 = vunpack.c.l.b16 %v530
  %v659 = vunpack.c.l.b16 %v531
  %v660 = vunpack.c.l.b16 %v532
  %v661 = vunpack.c.l.b16 %v533
  %v662 = vunpack.c.l.b16 %v534
  %v663 = vunpack.c.l.b16 %v535
  %v664 = vunpack.c.l.b16 %v536
  %v665 = vunpack.c.l.b16 %v537
  %v666 = vunpack.c.l.b16 %v538
  %v667 = vunpack.c.l.b16 %v539
  %v668 = vunpack.c.l.b16 %v540
  %v669 = vunpack.c.l.b16 %v541
  %v670 = vunpack.c.l.b16 %v542
  %v671 = vunpack.c.l.b16 %v543
  %v672 = vunpack.c.l.b16 %v544
  %v673 = vunpack.c.l.b16 %v545
  %v674 = vunpack.c.l.b16 %v546
  %v675 = vunpack.c.l.b16 %v547
  %v676 = vunpack.c.l.b16 %v548
  %v677 = vunpack.c.l.b16 %v549
  %v678 = vunpack.c.l.b16 %v550
  %v679 = vunpack.c.l.b16 %v551
  %v680 = vunpack.c.l.b16 %v552
  %v681 = vunpack.c.l.b16 %v553
  %v682 = vunpack.c.l.b16 %v554
  %v683 = vunpack.c.l.b16 %v555
  %v684 = vunpack.c.l.b16 %v556
  %v685 = vunpack.c.l.b16 %v557
  %v686 = vunpack.c.l.b16 %v558
  %v687 = vunpack.c.l.b16 %v559
  %v688 = vunpack.c.l.b16 %v560
  %v689 = vunpack.c.l.b16 %v561
  %v690 = vunpack.c.l.b16 %v562
  %v691 = vunpack.c.l.b16 %v563
  %v692 = vunpack.c.l.b16 %v564
  %v693 = vunpack.c.l.b16 %v565
  %v694 = vunpack.c.l.b16 %v566
  %v695 = vunpack.c.l.b16 %v567
  %v696 = vunpack.c.l.b16 %v568
  %v697 = vunpack.c.l.b16 %v569
  %v698 = vunpack.c.l.b16 %v570
  %v699 = vunpack.c.l.b16 %v571
  %v700 = vunpack.c.l.b16 %v572
  %v701 = vpack.c.b16 %v638, %v637
  %v702 = vpack.c.b16 %v640, %v639
  %v703 = vpack.c.b16 %v642, %v641
  %v704 = vpack.c.b16 %v644, %v643
  %v705 = vpack.c.b16 %v646, %v645
  %v706 = vpack.c.b16 %v648, %v647
  %v707 = vpack.c.b16 %v650, %v649
  %v708 = vpack.c.b16 %v652, %v651
  %v709 = vpack.c.b16 %v654, %v653
  %v710 = vpack.c.b16 %v656, %v655
  %v711 = vpack.c.b16 %v658, %v657
  %v712 = vpack.c.b16 %v660, %v659
  %v713 = vpack.c.b16 %v662, %v661
  %v714 = vpack.c.b16 %v664, %v663
  %v715 = vpack.c.b16 %v666, %v665
  %v716 = vpack.c.b16 %v668, %v667
  %v717 = vpack.c.b16 %v670, %v669
  %v718 = vpack.c.b16 %v672, %v671
  %v719 = vpack.c.b16 %v674, %v673
  %v720 = vpack.c.b16 %v676, %v675
  %v721 = vpack.c.b16 %v678, %v677
  %v722 = vpack.c.b16 %v680, %v679
  %v723 = vpack.c.b16 %v682, %v681
  %v724 = vpack.c.b16 %v684, %v683
  %v725 = vpack.c.b16 %v686, %v685
  %v726 = vpack.c.b16 %v688, %v687
  %v727 = vpack.c.b16 %v690, %v689
  %v728 = vpack.c.b16 %v692, %v691
  %v729 = vpack.c.b16 %v694, %v693
  %v730 = vpack.c.b16 %v696, %v695
  %v731 = vpack.c.b16 %v698, %v697
  %v732 = vpack.c.b16 %v700, %v699
  %765 = vmatprep.subr.bf16.mxu0 0
  %766 = vmatpush1.bf16.msra.mxu0 %v708
  %767 = vmatprep.subr.bf16.mxu0 0
  %768 = vmatpush1.bf16.msra.mxu0 %v707
  %769 = vmatprep.subr.bf16.mxu0 0
  %770 = vmatpush1.bf16.msra.mxu0 %v706
  %771 = vmatprep.subr.bf16.mxu0 0
  %772 = vmatpush1.bf16.msra.mxu0 %v705
  %773 = vmatprep.subr.bf16.mxu0 0
  %774 = vmatpush1.bf16.msra.mxu0 %v704
  %775 = vmatprep.subr.bf16.mxu0 0
  %776 = vmatpush1.bf16.msra.mxu0 %v703
  %777 = vmatprep.subr.bf16.mxu0 0
  %778 = vmatpush1.bf16.msra.mxu0 %v702
  %779 = vmatprep.subr.bf16.mxu0 0
  %780 = vmatpush1.bf16.msra.mxu0 %v701
  %781 = vmatprep.subr.bf16.mxu0 0
  %782 = vmatpush2.bf16.msra.mxu0 %v716
  %783 = vmatprep.subr.bf16.mxu0 0
  %784 = vmatpush2.bf16.msra.mxu0 %v715
  %785 = vmatprep.subr.bf16.mxu0 0
  %786 = vmatpush2.bf16.msra.mxu0 %v714
  %787 = vmatprep.subr.bf16.mxu0 0
  %788 = vmatpush2.bf16.msra.mxu0 %v713
  %789 = vmatprep.subr.bf16.mxu0 0
  %790 = vmatpush2.bf16.msra.mxu0 %v712
  %791 = vmatprep.subr.bf16.mxu0 0
  %792 = vmatpush2.bf16.msra.mxu0 %v711
  %793 = vmatprep.subr.bf16.mxu0 0
  %794 = vmatpush2.bf16.msra.mxu0 %v710
  %795 = vmatprep.subr.bf16.mxu0 0
  %796 = vmatpush2.bf16.msra.mxu0 %v709
  %797 = vmatprep.mubr.bf16.mxu0 %v446
  %798 = vmatmul.mubr.bf16.gmra.mxu0 %v445
  %v799 = vpop.f32.mrf.mxu0
  %v800 = vadd.f32 0.0, %v799
  %v801 = vpop.f32.mrf.mxu0
  %v802 = vpop.f32.mrf.mxu0
  %v803 = vadd.f32 0.0, %v802
  %v804 = vpop.f32.mrf.mxu0
  %805 = vmatprep.mubr.bf16.mxu0 %v450
  %806 = vmatmul.mubr.bf16.gmra.mxu0 %v449
  %v807 = vpop.f32.mrf.mxu0
  %v808 = vadd.f32 0.0, %v807
  %v809 = vpop.f32.mrf.mxu0
  %v810 = vpop.f32.mrf.mxu0
  %v811 = vadd.f32 0.0, %v810
  %v812 = vpop.f32.mrf.mxu0
  %813 = vmatprep.mubr.bf16.mxu0 %v454
  %814 = vmatmul.mubr.bf16.gmra.mxu0 %v453
  %v815 = vpop.f32.mrf.mxu0
  %v816 = vadd.f32 0.0, %v815
  %v817 = vpop.f32.mrf.mxu0
  %v818 = vpop.f32.mrf.mxu0
  %v819 = vadd.f32 0.0, %v818
  %v820 = vpop.f32.mrf.mxu0
  %821 = vmatprep.mubr.bf16.mxu0 %v458
  %822 = vmatmul.mubr.bf16.gmra.mxu0 %v457
  %v823 = vpop.f32.mrf.mxu0
  %v824 = vadd.f32 0.0, %v823
  %v825 = vpop.f32.mrf.mxu0
  %v826 = vpop.f32.mrf.mxu0
  %v827 = vadd.f32 0.0, %v826
  %v828 = vpop.f32.mrf.mxu0
  %829 = vmatprep.mubr.bf16.mxu0 %v478
  %830 = vmatmul.mubr.bf16.gmra.mxu0 %v477
  %v831 = vpop.f32.mrf.mxu0
  %v832 = vadd.f32 0.0, %v831
  %v833 = vpop.f32.mrf.mxu0
  %v834 = vpop.f32.mrf.mxu0
  %v835 = vadd.f32 0.0, %v834
  %v836 = vpop.f32.mrf.mxu0
  %837 = vmatprep.mubr.bf16.mxu0 %v482
  %838 = vmatmul.mubr.bf16.gmra.mxu0 %v481
  %v839 = vpop.f32.mrf.mxu0
  %v840 = vadd.f32 0.0, %v839
  %v841 = vpop.f32.mrf.mxu0
  %v842 = vpop.f32.mrf.mxu0
  %v843 = vadd.f32 0.0, %v842
  %v844 = vpop.f32.mrf.mxu0
  %845 = vmatprep.mubr.bf16.mxu0 %v486
  %846 = vmatmul.mubr.bf16.gmra.mxu0 %v485
  %v847 = vpop.f32.mrf.mxu0
  %v848 = vadd.f32 0.0, %v847
  %v849 = vpop.f32.mrf.mxu0
  %v850 = vpop.f32.mrf.mxu0
  %v851 = vadd.f32 0.0, %v850
  %v852 = vpop.f32.mrf.mxu0
  %853 = vmatprep.mubr.bf16.mxu0 %v490
  %854 = vmatmul.mubr.bf16.gmra.mxu0 %v489
  %v855 = vpop.f32.mrf.mxu0
  %v856 = vadd.f32 0.0, %v855
  %v857 = vpop.f32.mrf.mxu0
  %v858 = vpop.f32.mrf.mxu0
  %v859 = vadd.f32 0.0, %v858
  %v860 = vpop.f32.mrf.mxu0
  %861 = vdwg.mxu0
  %862 = vmatprep.subr.bf16.mxu0 0
  %863 = vmatpush1.bf16.msra.mxu0 %v724
  %864 = vmatprep.subr.bf16.mxu0 0
  %865 = vmatpush1.bf16.msra.mxu0 %v723
  %866 = vmatprep.subr.bf16.mxu0 0
  %867 = vmatpush1.bf16.msra.mxu0 %v722
  %868 = vmatprep.subr.bf16.mxu0 0
  %869 = vmatpush1.bf16.msra.mxu0 %v721
  %870 = vmatprep.subr.bf16.mxu0 0
  %871 = vmatpush1.bf16.msra.mxu0 %v720
  %872 = vmatprep.subr.bf16.mxu0 0
  %873 = vmatpush1.bf16.msra.mxu0 %v719
  %874 = vmatprep.subr.bf16.mxu0 0
  %875 = vmatpush1.bf16.msra.mxu0 %v718
  %876 = vmatprep.subr.bf16.mxu0 0
  %877 = vmatpush1.bf16.msra.mxu0 %v717
  %878 = vmatprep.subr.bf16.mxu0 0
  %879 = vmatpush2.bf16.msra.mxu0 %v732
  %880 = vmatprep.subr.bf16.mxu0 0
  %881 = vmatpush2.bf16.msra.mxu0 %v731
  %882 = vmatprep.subr.bf16.mxu0 0
  %883 = vmatpush2.bf16.msra.mxu0 %v730
  %884 = vmatprep.subr.bf16.mxu0 0
  %885 = vmatpush2.bf16.msra.mxu0 %v729
  %886 = vmatprep.subr.bf16.mxu0 0
  %887 = vmatpush2.bf16.msra.mxu0 %v728
  %888 = vmatprep.subr.bf16.mxu0 0
  %889 = vmatpush2.bf16.msra.mxu0 %v727
  %890 = vmatprep.subr.bf16.mxu0 0
  %891 = vmatpush2.bf16.msra.mxu0 %v726
  %892 = vmatprep.subr.bf16.mxu0 0
  %893 = vmatpush2.bf16.msra.mxu0 %v725
  %894 = vmatprep.mubr.bf16.mxu0 %v448
  %895 = vmatmul.mubr.bf16.gmra.mxu0 %v447
  %v896 = vpop.f32.mrf.mxu0
  %v897 = vadd.f32 %v800, %v896
  %v898 = vpop.f32.mrf.mxu0
  %v899 = vpop.f32.mrf.mxu0
  %v900 = vadd.f32 %v803, %v899
  %v901 = vpop.f32.mrf.mxu0
  %902 = vmatprep.mubr.bf16.mxu0 %v452
  %903 = vmatmul.mubr.bf16.gmra.mxu0 %v451
  %v904 = vpop.f32.mrf.mxu0
  %v905 = vadd.f32 %v808, %v904
  %v906 = vpop.f32.mrf.mxu0
  %v907 = vpop.f32.mrf.mxu0
  %v908 = vadd.f32 %v811, %v907
  %v909 = vpop.f32.mrf.mxu0
  %910 = vmatprep.mubr.bf16.mxu0 %v456
  %911 = vmatmul.mubr.bf16.gmra.mxu0 %v455
  %v912 = vpop.f32.mrf.mxu0
  %v913 = vadd.f32 %v816, %v912
  %v914 = vpop.f32.mrf.mxu0
  %v915 = vpop.f32.mrf.mxu0
  %v916 = vadd.f32 %v819, %v915
  %v917 = vpop.f32.mrf.mxu0
  %918 = vmatprep.mubr.bf16.mxu0 %v460
  %919 = vmatmul.mubr.bf16.gmra.mxu0 %v459
  %v920 = vpop.f32.mrf.mxu0
  %v921 = vadd.f32 %v824, %v920
  %v922 = vpop.f32.mrf.mxu0
  %v923 = vpop.f32.mrf.mxu0
  %v924 = vadd.f32 %v827, %v923
  %v925 = vpop.f32.mrf.mxu0
  %926 = vmatprep.mubr.bf16.mxu0 %v480
  %927 = vmatmul.mubr.bf16.gmra.mxu0 %v479
  %v928 = vpop.f32.mrf.mxu0
  %v929 = vadd.f32 %v832, %v928
  %v930 = vpop.f32.mrf.mxu0
  %v931 = vpop.f32.mrf.mxu0
  %v932 = vadd.f32 %v835, %v931
  %v933 = vpop.f32.mrf.mxu0
  %934 = vmatprep.mubr.bf16.mxu0 %v484
  %935 = vmatmul.mubr.bf16.gmra.mxu0 %v483
  %v936 = vpop.f32.mrf.mxu0
  %v937 = vadd.f32 %v840, %v936
  %v938 = vpop.f32.mrf.mxu0
  %v939 = vpop.f32.mrf.mxu0
  %v940 = vadd.f32 %v843, %v939
  %v941 = vpop.f32.mrf.mxu0
  %942 = vmatprep.mubr.bf16.mxu0 %v488
  %943 = vmatmul.mubr.bf16.gmra.mxu0 %v487
  %v944 = vpop.f32.mrf.mxu0
  %v945 = vadd.f32 %v848, %v944
  %v946 = vpop.f32.mrf.mxu0
  %v947 = vpop.f32.mrf.mxu0
  %v948 = vadd.f32 %v851, %v947
  %v949 = vpop.f32.mrf.mxu0
  %950 = vmatprep.mubr.bf16.mxu0 %v492
  %951 = vmatmul.mubr.bf16.gmra.mxu0 %v491
  %v952 = vpop.f32.mrf.mxu0
  %v953 = vadd.f32 %v856, %v952
  %v954 = vpop.f32.mrf.mxu0
  %v955 = vpop.f32.mrf.mxu0
  %v956 = vadd.f32 %v859, %v955
  %v957 = vpop.f32.mrf.mxu0
  %958 = vdwg.mxu0
  %v959 = vadd.f32 %v21, %v897
  %v960 = vadd.f32 %v21, %v900
  %v961 = vadd.f32 %v21, %v905
  %v962 = vadd.f32 %v21, %v908
  %v963 = vadd.f32 %v21, %v913
  %v964 = vadd.f32 %v21, %v916
  %v965 = vadd.f32 %v21, %v921
  %v966 = vadd.f32 %v21, %v924
  %v967 = vadd.f32 %v21, %v929
  %v968 = vadd.f32 %v21, %v932
  %v969 = vadd.f32 %v21, %v937
  %v970 = vadd.f32 %v21, %v940
  %v971 = vadd.f32 %v21, %v945
  %v972 = vadd.f32 %v21, %v948
  %v973 = vadd.f32 %v21, %v953
  %v974 = vadd.f32 %v21, %v956
  %s975 = sadd.s32 %s15, 1
  %s976 = smul.u32 %s975, 4
  %s977 = smul.addr %s976, 4
  %s978 = scalar_lea.vmem %s0, %s977
  %v979 = vld [vmem:[%s978] sm:$0xff]
  %v980 = vld [vmem:[%s978 + $0x8] sm:$0x11]
  %v981 = vld [vmem:[%s978 + $0x10] sm:$0xff]
  %v982 = vld [vmem:[%s978 + $0x18] sm:$0x11]
  %v983 = vld [vmem:[%s978 + $0x20] sm:$0xff]
  %v984 = vld [vmem:[%s978 + $0x28] sm:$0x11]
  %v985 = vld [vmem:[%s978 + $0x30] sm:$0xff]
  %v986 = vld [vmem:[%s978 + $0x38] sm:$0x11]
  %v987 = vld [vmem:[%s978 + $0x40] sm:$0xff]
  %v988 = vld [vmem:[%s978 + $0x48] sm:$0x11]
  %v989 = vld [vmem:[%s978 + $0x50] sm:$0xff]
  %v990 = vld [vmem:[%s978 + $0x58] sm:$0x11]
  %v991 = vld [vmem:[%s978 + $0x60] sm:$0xff]
  %v992 = vld [vmem:[%s978 + $0x68] sm:$0x11]
  %v993 = vld [vmem:[%s978 + $0x70] sm:$0xff]
  %v994 = vld [vmem:[%s978 + $0x78] sm:$0x11]
  %v1003 = vunpack.c.l.b16 %v979
  %v1004 = vunpack.c.h.b16 %v979
  %v1005 = vunpack.c.l.b16 %v981
  %v1006 = vunpack.c.h.b16 %v981
  %v1007 = vunpack.c.l.b16 %v983
  %v1008 = vunpack.c.h.b16 %v983
  %v1009 = vunpack.c.l.b16 %v985
  %v1010 = vunpack.c.h.b16 %v985
  %v1011 = vunpack.c.l.b16 %v987
  %v1012 = vunpack.c.h.b16 %v987
  %v1013 = vunpack.c.l.b16 %v989
  %v1014 = vunpack.c.h.b16 %v989
  %v1015 = vunpack.c.l.b16 %v991
  %v1016 = vunpack.c.h.b16 %v991
  %v1017 = vunpack.c.l.b16 %v993
  %v1018 = vunpack.c.h.b16 %v993
  %v1027 = vunpack.c.l.b16 %v980
  %v1028 = vunpack.c.h.b16 %v980
  %v1029 = vunpack.c.l.b16 %v982
  %v1030 = vunpack.c.h.b16 %v982
  %v1031 = vunpack.c.l.b16 %v984
  %v1032 = vunpack.c.h.b16 %v984
  %v1033 = vunpack.c.l.b16 %v986
  %v1034 = vunpack.c.h.b16 %v986
  %v1035 = vunpack.c.l.b16 %v988
  %v1036 = vunpack.c.h.b16 %v988
  %v1037 = vunpack.c.l.b16 %v990
  %v1038 = vunpack.c.h.b16 %v990
  %v1039 = vunpack.c.l.b16 %v992
  %v1040 = vunpack.c.h.b16 %v992
  %v1041 = vunpack.c.l.b16 %v994
  %v1042 = vunpack.c.h.b16 %v994
  %v1043 = vpack.c.b16 %v1027, %v1003
  %v1044 = vpack.c.b16 %v1028, %v1004
  %v1045 = vpack.c.b16 %v1029, %v1005
  %v1046 = vpack.c.b16 %v1030, %v1006
  %v1047 = vpack.c.b16 %v1031, %v1007
  %v1048 = vpack.c.b16 %v1032, %v1008
  %v1049 = vpack.c.b16 %v1033, %v1009
  %v1050 = vpack.c.b16 %v1034, %v1010
  %v1051 = vpack.c.b16 %v1035, %v1011
  %v1052 = vpack.c.b16 %v1036, %v1012
  %v1053 = vpack.c.b16 %v1037, %v1013
  %v1054 = vpack.c.b16 %v1038, %v1014
  %v1055 = vpack.c.b16 %v1039, %v1015
  %v1056 = vpack.c.b16 %v1040, %v1016
  %v1057 = vpack.c.b16 %v1041, %v1017
  %v1058 = vpack.c.b16 %v1042, %v1018
  %v1060 = vshrl.u32 %v1043, 16
  %v1062 = vshll.u32 %v1043, 16
  %v1064 = vrot.slane %v1062, 1
  %v1065 = vor.u32 %v1060, %v1064
  %v1067 = vshrl.u32 %v1044, 16
  %v1069 = vshll.u32 %v1044, 16
  %v1071 = vrot.slane %v1069, 1
  %v1072 = vor.u32 %v1067, %v1071
  %v1074 = vshrl.u32 %v1045, 16
  %v1076 = vshll.u32 %v1045, 16
  %v1078 = vrot.slane %v1076, 1
  %v1079 = vor.u32 %v1074, %v1078
  %v1081 = vshrl.u32 %v1046, 16
  %v1083 = vshll.u32 %v1046, 16
  %v1085 = vrot.slane %v1083, 1
  %v1086 = vor.u32 %v1081, %v1085
  %v1088 = vshrl.u32 %v1047, 16
  %v1090 = vshll.u32 %v1047, 16
  %v1092 = vrot.slane %v1090, 1
  %v1093 = vor.u32 %v1088, %v1092
  %v1095 = vshrl.u32 %v1048, 16
  %v1097 = vshll.u32 %v1048, 16
  %v1099 = vrot.slane %v1097, 1
  %v1100 = vor.u32 %v1095, %v1099
  %v1102 = vshrl.u32 %v1049, 16
  %v1104 = vshll.u32 %v1049, 16
  %v1106 = vrot.slane %v1104, 1
  %v1107 = vor.u32 %v1102, %v1106
  %v1109 = vshrl.u32 %v1050, 16
  %v1111 = vshll.u32 %v1050, 16
  %v1113 = vrot.slane %v1111, 1
  %v1114 = vor.u32 %v1109, %v1113
  %v1116 = vshrl.u32 %v1051, 16
  %v1118 = vshll.u32 %v1051, 16
  %v1120 = vrot.slane %v1118, 1
  %v1121 = vor.u32 %v1116, %v1120
  %v1123 = vshrl.u32 %v1052, 16
  %v1125 = vshll.u32 %v1052, 16
  %v1127 = vrot.slane %v1125, 1
  %v1128 = vor.u32 %v1123, %v1127
  %v1130 = vshrl.u32 %v1053, 16
  %v1132 = vshll.u32 %v1053, 16
  %v1134 = vrot.slane %v1132, 1
  %v1135 = vor.u32 %v1130, %v1134
  %v1137 = vshrl.u32 %v1054, 16
  %v1139 = vshll.u32 %v1054, 16
  %v1141 = vrot.slane %v1139, 1
  %v1142 = vor.u32 %v1137, %v1141
  %v1144 = vshrl.u32 %v1055, 16
  %v1146 = vshll.u32 %v1055, 16
  %v1148 = vrot.slane %v1146, 1
  %v1149 = vor.u32 %v1144, %v1148
  %v1151 = vshrl.u32 %v1056, 16
  %v1153 = vshll.u32 %v1056, 16
  %v1155 = vrot.slane %v1153, 1
  %v1156 = vor.u32 %v1151, %v1155
  %v1158 = vshrl.u32 %v1057, 16
  %v1160 = vshll.u32 %v1057, 16
  %v1162 = vrot.slane %v1160, 1
  %v1163 = vor.u32 %v1158, %v1162
  %v1165 = vshrl.u32 %v1058, 16
  %v1167 = vshll.u32 %v1058, 16
  %v1169 = vrot.slane %v1167, 1
  %v1170 = vor.u32 %v1165, %v1169
  %v1171 = vunpack.c.l.b16 %v1065
  %v1172 = vunpack.c.l.b16 %v1072
  %v1173 = vunpack.c.l.b16 %v1079
  %v1174 = vunpack.c.l.b16 %v1086
  %v1175 = vunpack.c.l.b16 %v1093
  %v1176 = vunpack.c.l.b16 %v1100
  %v1177 = vunpack.c.l.b16 %v1107
  %v1178 = vunpack.c.l.b16 %v1114
  %v1179 = vunpack.c.l.b16 %v1121
  %v1180 = vunpack.c.l.b16 %v1128
  %v1181 = vunpack.c.l.b16 %v1135
  %v1182 = vunpack.c.l.b16 %v1142
  %v1183 = vunpack.c.l.b16 %v1149
  %v1184 = vunpack.c.l.b16 %v1156
  %v1185 = vunpack.c.l.b16 %v1163
  %v1186 = vunpack.c.l.b16 %v1170
  %s1187 = sadd.s32 %s976, 36
  %s1188 = smul.addr %s1187, 4
  %s1189 = scalar_lea.vmem %s0, %s1188
  %v1190 = vld [vmem:[%s1189] sm:$0xff]
  %v1191 = vld [vmem:[%s1189 + $0x8] sm:$0x11]
  %v1192 = vld [vmem:[%s1189 + $0x10] sm:$0xff]
  %v1193 = vld [vmem:[%s1189 + $0x18] sm:$0x11]
  %v1194 = vld [vmem:[%s1189 + $0x20] sm:$0xff]
  %v1195 = vld [vmem:[%s1189 + $0x28] sm:$0x11]
  %v1196 = vld [vmem:[%s1189 + $0x30] sm:$0xff]
  %v1197 = vld [vmem:[%s1189 + $0x38] sm:$0x11]
  %v1198 = vld [vmem:[%s1189 + $0x40] sm:$0xff]
  %v1199 = vld [vmem:[%s1189 + $0x48] sm:$0x11]
  %v1200 = vld [vmem:[%s1189 + $0x50] sm:$0xff]
  %v1201 = vld [vmem:[%s1189 + $0x58] sm:$0x11]
  %v1202 = vld [vmem:[%s1189 + $0x60] sm:$0xff]
  %v1203 = vld [vmem:[%s1189 + $0x68] sm:$0x11]
  %v1204 = vld [vmem:[%s1189 + $0x70] sm:$0xff]
  %v1205 = vld [vmem:[%s1189 + $0x78] sm:$0x11]
  %v1214 = vunpack.c.l.b16 %v1190
  %v1215 = vunpack.c.h.b16 %v1190
  %v1216 = vunpack.c.l.b16 %v1192
  %v1217 = vunpack.c.h.b16 %v1192
  %v1218 = vunpack.c.l.b16 %v1194
  %v1219 = vunpack.c.h.b16 %v1194
  %v1220 = vunpack.c.l.b16 %v1196
  %v1221 = vunpack.c.h.b16 %v1196
  %v1222 = vunpack.c.l.b16 %v1198
  %v1223 = vunpack.c.h.b16 %v1198
  %v1224 = vunpack.c.l.b16 %v1200
  %v1225 = vunpack.c.h.b16 %v1200
  %v1226 = vunpack.c.l.b16 %v1202
  %v1227 = vunpack.c.h.b16 %v1202
  %v1228 = vunpack.c.l.b16 %v1204
  %v1229 = vunpack.c.h.b16 %v1204
  %v1238 = vunpack.c.l.b16 %v1191
  %v1239 = vunpack.c.h.b16 %v1191
  %v1240 = vunpack.c.l.b16 %v1193
  %v1241 = vunpack.c.h.b16 %v1193
  %v1242 = vunpack.c.l.b16 %v1195
  %v1243 = vunpack.c.h.b16 %v1195
  %v1244 = vunpack.c.l.b16 %v1197
  %v1245 = vunpack.c.h.b16 %v1197
  %v1246 = vunpack.c.l.b16 %v1199
  %v1247 = vunpack.c.h.b16 %v1199
  %v1248 = vunpack.c.l.b16 %v1201
  %v1249 = vunpack.c.h.b16 %v1201
  %v1250 = vunpack.c.l.b16 %v1203
  %v1251 = vunpack.c.h.b16 %v1203
  %v1252 = vunpack.c.l.b16 %v1205
  %v1253 = vunpack.c.h.b16 %v1205
  %v1254 = vpack.c.b16 %v1238, %v1214
  %v1255 = vpack.c.b16 %v1239, %v1215
  %v1256 = vpack.c.b16 %v1240, %v1216
  %v1257 = vpack.c.b16 %v1241, %v1217
  %v1258 = vpack.c.b16 %v1242, %v1218
  %v1259 = vpack.c.b16 %v1243, %v1219
  %v1260 = vpack.c.b16 %v1244, %v1220
  %v1261 = vpack.c.b16 %v1245, %v1221
  %v1262 = vpack.c.b16 %v1246, %v1222
  %v1263 = vpack.c.b16 %v1247, %v1223
  %v1264 = vpack.c.b16 %v1248, %v1224
  %v1265 = vpack.c.b16 %v1249, %v1225
  %v1266 = vpack.c.b16 %v1250, %v1226
  %v1267 = vpack.c.b16 %v1251, %v1227
  %v1268 = vpack.c.b16 %v1252, %v1228
  %v1269 = vpack.c.b16 %v1253, %v1229
  %v1271 = vshrl.u32 %v1254, 16
  %v1273 = vshll.u32 %v1254, 16
  %v1275 = vrot.slane %v1273, 1
  %v1276 = vor.u32 %v1271, %v1275
  %v1278 = vshrl.u32 %v1255, 16
  %v1280 = vshll.u32 %v1255, 16
  %v1282 = vrot.slane %v1280, 1
  %v1283 = vor.u32 %v1278, %v1282
  %v1285 = vshrl.u32 %v1256, 16
  %v1287 = vshll.u32 %v1256, 16
  %v1289 = vrot.slane %v1287, 1
  %v1290 = vor.u32 %v1285, %v1289
  %v1292 = vshrl.u32 %v1257, 16
  %v1294 = vshll.u32 %v1257, 16
  %v1296 = vrot.slane %v1294, 1
  %v1297 = vor.u32 %v1292, %v1296
  %v1299 = vshrl.u32 %v1258, 16
  %v1301 = vshll.u32 %v1258, 16
  %v1303 = vrot.slane %v1301, 1
  %v1304 = vor.u32 %v1299, %v1303
  %v1306 = vshrl.u32 %v1259, 16
  %v1308 = vshll.u32 %v1259, 16
  %v1310 = vrot.slane %v1308, 1
  %v1311 = vor.u32 %v1306, %v1310
  %v1313 = vshrl.u32 %v1260, 16
  %v1315 = vshll.u32 %v1260, 16
  %v1317 = vrot.slane %v1315, 1
  %v1318 = vor.u32 %v1313, %v1317
  %v1320 = vshrl.u32 %v1261, 16
  %v1322 = vshll.u32 %v1261, 16
  %v1324 = vrot.slane %v1322, 1
  %v1325 = vor.u32 %v1320, %v1324
  %v1327 = vshrl.u32 %v1262, 16
  %v1329 = vshll.u32 %v1262, 16
  %v1331 = vrot.slane %v1329, 1
  %v1332 = vor.u32 %v1327, %v1331
  %v1334 = vshrl.u32 %v1263, 16
  %v1336 = vshll.u32 %v1263, 16
  %v1338 = vrot.slane %v1336, 1
  %v1339 = vor.u32 %v1334, %v1338
  %v1341 = vshrl.u32 %v1264, 16
  %v1343 = vshll.u32 %v1264, 16
  %v1345 = vrot.slane %v1343, 1
  %v1346 = vor.u32 %v1341, %v1345
  %v1348 = vshrl.u32 %v1265, 16
  %v1350 = vshll.u32 %v1265, 16
  %v1352 = vrot.slane %v1350, 1
  %v1353 = vor.u32 %v1348, %v1352
  %v1355 = vshrl.u32 %v1266, 16
  %v1357 = vshll.u32 %v1266, 16
  %v1359 = vrot.slane %v1357, 1
  %v1360 = vor.u32 %v1355, %v1359
  %v1362 = vshrl.u32 %v1267, 16
  %v1364 = vshll.u32 %v1267, 16
  %v1366 = vrot.slane %v1364, 1
  %v1367 = vor.u32 %v1362, %v1366
  %v1369 = vshrl.u32 %v1268, 16
  %v1371 = vshll.u32 %v1268, 16
  %v1373 = vrot.slane %v1371, 1
  %v1374 = vor.u32 %v1369, %v1373
  %v1376 = vshrl.u32 %v1269, 16
  %v1378 = vshll.u32 %v1269, 16
  %v1380 = vrot.slane %v1378, 1
  %v1381 = vor.u32 %v1376, %v1380
  %v1382 = vunpack.c.l.b16 %v1276
  %v1383 = vunpack.c.l.b16 %v1283
  %v1384 = vunpack.c.l.b16 %v1290
  %v1385 = vunpack.c.l.b16 %v1297
  %v1386 = vunpack.c.l.b16 %v1304
  %v1387 = vunpack.c.l.b16 %v1311
  %v1388 = vunpack.c.l.b16 %v1318
  %v1389 = vunpack.c.l.b16 %v1325
  %v1390 = vunpack.c.l.b16 %v1332
  %v1391 = vunpack.c.l.b16 %v1339
  %v1392 = vunpack.c.l.b16 %v1346
  %v1393 = vunpack.c.l.b16 %v1353
  %v1394 = vunpack.c.l.b16 %v1360
  %v1395 = vunpack.c.l.b16 %v1367
  %v1396 = vunpack.c.l.b16 %v1374
  %v1397 = vunpack.c.l.b16 %v1381
  %v1398 = vpack.c.b16 %v1005, %v1003
  %v1399 = vpack.c.b16 %v1006, %v1004
  %v1400 = vpack.c.b16 %v1173, %v1171
  %v1401 = vpack.c.b16 %v1174, %v1172
  %v1402 = vpack.c.b16 %v1009, %v1007
  %v1403 = vpack.c.b16 %v1010, %v1008
  %v1404 = vpack.c.b16 %v1177, %v1175
  %v1405 = vpack.c.b16 %v1178, %v1176
  %v1406 = vpack.c.b16 %v1013, %v1011
  %v1407 = vpack.c.b16 %v1014, %v1012
  %v1408 = vpack.c.b16 %v1181, %v1179
  %v1409 = vpack.c.b16 %v1182, %v1180
  %v1410 = vpack.c.b16 %v1017, %v1015
  %v1411 = vpack.c.b16 %v1018, %v1016
  %v1412 = vpack.c.b16 %v1185, %v1183
  %v1413 = vpack.c.b16 %v1186, %v1184
  %v1430 = vpack.c.b16 %v1216, %v1214
  %v1431 = vpack.c.b16 %v1217, %v1215
  %v1432 = vpack.c.b16 %v1384, %v1382
  %v1433 = vpack.c.b16 %v1385, %v1383
  %v1434 = vpack.c.b16 %v1220, %v1218
  %v1435 = vpack.c.b16 %v1221, %v1219
  %v1436 = vpack.c.b16 %v1388, %v1386
  %v1437 = vpack.c.b16 %v1389, %v1387
  %v1438 = vpack.c.b16 %v1224, %v1222
  %v1439 = vpack.c.b16 %v1225, %v1223
  %v1440 = vpack.c.b16 %v1392, %v1390
  %v1441 = vpack.c.b16 %v1393, %v1391
  %v1442 = vpack.c.b16 %v1228, %v1226
  %v1443 = vpack.c.b16 %v1229, %v1227
  %v1444 = vpack.c.b16 %v1396, %v1394
  %v1445 = vpack.c.b16 %v1397, %v1395
  %s1462 = scalar_lea.vmem %s1, 256
  %v1463 = vld [vmem:[%s1462] sm:$0xf]
  %v1464 = vld [vmem:[%s1462 + $0x4] sm:$0xf]
  %v1465 = vld [vmem:[%s1462 + $0x8] sm:$0xf]
  %v1466 = vld [vmem:[%s1462 + $0xc] sm:$0xf]
  %v1467 = vld [vmem:[%s1462 + $0x10] sm:$0xf]
  %v1468 = vld [vmem:[%s1462 + $0x14] sm:$0xf]
  %v1469 = vld [vmem:[%s1462 + $0x18] sm:$0xf]
  %v1470 = vld [vmem:[%s1462 + $0x1c] sm:$0xf]
  %v1471 = vld [vmem:[%s1462 + $0x20] sm:$0xf]
  %v1472 = vld [vmem:[%s1462 + $0x24] sm:$0xf]
  %v1473 = vld [vmem:[%s1462 + $0x28] sm:$0xf]
  %v1474 = vld [vmem:[%s1462 + $0x2c] sm:$0xf]
  %v1475 = vld [vmem:[%s1462 + $0x30] sm:$0xf]
  %v1476 = vld [vmem:[%s1462 + $0x34] sm:$0xf]
  %v1477 = vld [vmem:[%s1462 + $0x38] sm:$0xf]
  %v1478 = vld [vmem:[%s1462 + $0x3c] sm:$0xf]
  %v1479 = vld [vmem:[%s1462 + $0x40] sm:$0xf]
  %v1480 = vld [vmem:[%s1462 + $0x44] sm:$0xf]
  %v1481 = vld [vmem:[%s1462 + $0x48] sm:$0xf]
  %v1482 = vld [vmem:[%s1462 + $0x4c] sm:$0xf]
  %v1483 = vld [vmem:[%s1462 + $0x50] sm:$0xf]
  %v1484 = vld [vmem:[%s1462 + $0x54] sm:$0xf]
  %v1485 = vld [vmem:[%s1462 + $0x58] sm:$0xf]
  %v1486 = vld [vmem:[%s1462 + $0x5c] sm:$0xf]
  %v1487 = vld [vmem:[%s1462 + $0x60] sm:$0xf]
  %v1488 = vld [vmem:[%s1462 + $0x64] sm:$0xf]
  %v1489 = vld [vmem:[%s1462 + $0x68] sm:$0xf]
  %v1490 = vld [vmem:[%s1462 + $0x6c] sm:$0xf]
  %v1491 = vld [vmem:[%s1462 + $0x70] sm:$0xf]
  %v1492 = vld [vmem:[%s1462 + $0x74] sm:$0xf]
  %v1493 = vld [vmem:[%s1462 + $0x78] sm:$0xf]
  %v1494 = vld [vmem:[%s1462 + $0x7c] sm:$0xf]
  %v1495 = vld [vmem:[%s1462 + $0x80] sm:$0xf]
  %v1496 = vld [vmem:[%s1462 + $0x84] sm:$0xf]
  %v1497 = vld [vmem:[%s1462 + $0x88] sm:$0xf]
  %v1498 = vld [vmem:[%s1462 + $0x8c] sm:$0xf]
  %v1499 = vld [vmem:[%s1462 + $0x90] sm:$0xf]
  %v1500 = vld [vmem:[%s1462 + $0x94] sm:$0xf]
  %v1501 = vld [vmem:[%s1462 + $0x98] sm:$0xf]
  %v1502 = vld [vmem:[%s1462 + $0x9c] sm:$0xf]
  %v1503 = vld [vmem:[%s1462 + $0xa0] sm:$0xf]
  %v1504 = vld [vmem:[%s1462 + $0xa4] sm:$0xf]
  %v1505 = vld [vmem:[%s1462 + $0xa8] sm:$0xf]
  %v1506 = vld [vmem:[%s1462 + $0xac] sm:$0xf]
  %v1507 = vld [vmem:[%s1462 + $0xb0] sm:$0xf]
  %v1508 = vld [vmem:[%s1462 + $0xb4] sm:$0xf]
  %v1509 = vld [vmem:[%s1462 + $0xb8] sm:$0xf]
  %v1510 = vld [vmem:[%s1462 + $0xbc] sm:$0xf]
  %v1511 = vld [vmem:[%s1462 + $0xc0] sm:$0xf]
  %v1512 = vld [vmem:[%s1462 + $0xc4] sm:$0xf]
  %v1513 = vld [vmem:[%s1462 + $0xc8] sm:$0xf]
  %v1514 = vld [vmem:[%s1462 + $0xcc] sm:$0xf]
  %v1515 = vld [vmem:[%s1462 + $0xd0] sm:$0xf]
  %v1516 = vld [vmem:[%s1462 + $0xd4] sm:$0xf]
  %v1517 = vld [vmem:[%s1462 + $0xd8] sm:$0xf]
  %v1518 = vld [vmem:[%s1462 + $0xdc] sm:$0xf]
  %v1519 = vld [vmem:[%s1462 + $0xe0] sm:$0xf]
  %v1520 = vld [vmem:[%s1462 + $0xe4] sm:$0xf]
  %v1521 = vld [vmem:[%s1462 + $0xe8] sm:$0xf]
  %v1522 = vld [vmem:[%s1462 + $0xec] sm:$0xf]
  %v1523 = vld [vmem:[%s1462 + $0xf0] sm:$0xf]
  %v1524 = vld [vmem:[%s1462 + $0xf4] sm:$0xf]
  %v1525 = vld [vmem:[%s1462 + $0xf8] sm:$0xf]
  %v1526 = vld [vmem:[%s1462 + $0xfc] sm:$0xf]
  %v1591 = vunpack.c.l.b16 %v1463
  %v1592 = vunpack.c.l.b16 %v1464
  %v1593 = vunpack.c.l.b16 %v1465
  %v1594 = vunpack.c.l.b16 %v1466
  %v1595 = vunpack.c.l.b16 %v1467
  %v1596 = vunpack.c.l.b16 %v1468
  %v1597 = vunpack.c.l.b16 %v1469
  %v1598 = vunpack.c.l.b16 %v1470
  %v1599 = vunpack.c.l.b16 %v1471
  %v1600 = vunpack.c.l.b16 %v1472
  %v1601 = vunpack.c.l.b16 %v1473
  %v1602 = vunpack.c.l.b16 %v1474
  %v1603 = vunpack.c.l.b16 %v1475
  %v1604 = vunpack.c.l.b16 %v1476
  %v1605 = vunpack.c.l.b16 %v1477
  %v1606 = vunpack.c.l.b16 %v1478
  %v1607 = vunpack.c.l.b16 %v1479
  %v1608 = vunpack.c.l.b16 %v1480
  %v1609 = vunpack.c.l.b16 %v1481
  %v1610 = vunpack.c.l.b16 %v1482
  %v1611 = vunpack.c.l.b16 %v1483
  %v1612 = vunpack.c.l.b16 %v1484
  %v1613 = vunpack.c.l.b16 %v1485
  %v1614 = vunpack.c.l.b16 %v1486
  %v1615 = vunpack.c.l.b16 %v1487
  %v1616 = vunpack.c.l.b16 %v1488
  %v1617 = vunpack.c.l.b16 %v1489
  %v1618 = vunpack.c.l.b16 %v1490
  %v1619 = vunpack.c.l.b16 %v1491
  %v1620 = vunpack.c.l.b16 %v1492
  %v1621 = vunpack.c.l.b16 %v1493
  %v1622 = vunpack.c.l.b16 %v1494
  %v1623 = vunpack.c.l.b16 %v1495
  %v1624 = vunpack.c.l.b16 %v1496
  %v1625 = vunpack.c.l.b16 %v1497
  %v1626 = vunpack.c.l.b16 %v1498
  %v1627 = vunpack.c.l.b16 %v1499
  %v1628 = vunpack.c.l.b16 %v1500
  %v1629 = vunpack.c.l.b16 %v1501
  %v1630 = vunpack.c.l.b16 %v1502
  %v1631 = vunpack.c.l.b16 %v1503
  %v1632 = vunpack.c.l.b16 %v1504
  %v1633 = vunpack.c.l.b16 %v1505
  %v1634 = vunpack.c.l.b16 %v1506
  %v1635 = vunpack.c.l.b16 %v1507
  %v1636 = vunpack.c.l.b16 %v1508
  %v1637 = vunpack.c.l.b16 %v1509
  %v1638 = vunpack.c.l.b16 %v1510
  %v1639 = vunpack.c.l.b16 %v1511
  %v1640 = vunpack.c.l.b16 %v1512
  %v1641 = vunpack.c.l.b16 %v1513
  %v1642 = vunpack.c.l.b16 %v1514
  %v1643 = vunpack.c.l.b16 %v1515
  %v1644 = vunpack.c.l.b16 %v1516
  %v1645 = vunpack.c.l.b16 %v1517
  %v1646 = vunpack.c.l.b16 %v1518
  %v1647 = vunpack.c.l.b16 %v1519
  %v1648 = vunpack.c.l.b16 %v1520
  %v1649 = vunpack.c.l.b16 %v1521
  %v1650 = vunpack.c.l.b16 %v1522
  %v1651 = vunpack.c.l.b16 %v1523
  %v1652 = vunpack.c.l.b16 %v1524
  %v1653 = vunpack.c.l.b16 %v1525
  %v1654 = vunpack.c.l.b16 %v1526
  %v1655 = vpack.c.b16 %v1592, %v1591
  %v1656 = vpack.c.b16 %v1594, %v1593
  %v1657 = vpack.c.b16 %v1596, %v1595
  %v1658 = vpack.c.b16 %v1598, %v1597
  %v1659 = vpack.c.b16 %v1600, %v1599
  %v1660 = vpack.c.b16 %v1602, %v1601
  %v1661 = vpack.c.b16 %v1604, %v1603
  %v1662 = vpack.c.b16 %v1606, %v1605
  %v1663 = vpack.c.b16 %v1608, %v1607
  %v1664 = vpack.c.b16 %v1610, %v1609
  %v1665 = vpack.c.b16 %v1612, %v1611
  %v1666 = vpack.c.b16 %v1614, %v1613
  %v1667 = vpack.c.b16 %v1616, %v1615
  %v1668 = vpack.c.b16 %v1618, %v1617
  %v1669 = vpack.c.b16 %v1620, %v1619
  %v1670 = vpack.c.b16 %v1622, %v1621
  %v1671 = vpack.c.b16 %v1624, %v1623
  %v1672 = vpack.c.b16 %v1626, %v1625
  %v1673 = vpack.c.b16 %v1628, %v1627
  %v1674 = vpack.c.b16 %v1630, %v1629
  %v1675 = vpack.c.b16 %v1632, %v1631
  %v1676 = vpack.c.b16 %v1634, %v1633
  %v1677 = vpack.c.b16 %v1636, %v1635
  %v1678 = vpack.c.b16 %v1638, %v1637
  %v1679 = vpack.c.b16 %v1640, %v1639
  %v1680 = vpack.c.b16 %v1642, %v1641
  %v1681 = vpack.c.b16 %v1644, %v1643
  %v1682 = vpack.c.b16 %v1646, %v1645
  %v1683 = vpack.c.b16 %v1648, %v1647
  %v1684 = vpack.c.b16 %v1650, %v1649
  %v1685 = vpack.c.b16 %v1652, %v1651
  %v1686 = vpack.c.b16 %v1654, %v1653
  %1719 = vmatprep.subr.bf16.mxu0 0
  %1720 = vmatpush1.bf16.msra.mxu0 %v1662
  %1721 = vmatprep.subr.bf16.mxu0 0
  %1722 = vmatpush1.bf16.msra.mxu0 %v1661
  %1723 = vmatprep.subr.bf16.mxu0 0
  %1724 = vmatpush1.bf16.msra.mxu0 %v1660
  %1725 = vmatprep.subr.bf16.mxu0 0
  %1726 = vmatpush1.bf16.msra.mxu0 %v1659
  %1727 = vmatprep.subr.bf16.mxu0 0
  %1728 = vmatpush1.bf16.msra.mxu0 %v1658
  %1729 = vmatprep.subr.bf16.mxu0 0
  %1730 = vmatpush1.bf16.msra.mxu0 %v1657
  %1731 = vmatprep.subr.bf16.mxu0 0
  %1732 = vmatpush1.bf16.msra.mxu0 %v1656
  %1733 = vmatprep.subr.bf16.mxu0 0
  %1734 = vmatpush1.bf16.msra.mxu0 %v1655
  %1735 = vmatprep.subr.bf16.mxu0 0
  %1736 = vmatpush2.bf16.msra.mxu0 %v1670
  %1737 = vmatprep.subr.bf16.mxu0 0
  %1738 = vmatpush2.bf16.msra.mxu0 %v1669
  %1739 = vmatprep.subr.bf16.mxu0 0
  %1740 = vmatpush2.bf16.msra.mxu0 %v1668
  %1741 = vmatprep.subr.bf16.mxu0 0
  %1742 = vmatpush2.bf16.msra.mxu0 %v1667
  %1743 = vmatprep.subr.bf16.mxu0 0
  %1744 = vmatpush2.bf16.msra.mxu0 %v1666
  %1745 = vmatprep.subr.bf16.mxu0 0
  %1746 = vmatpush2.bf16.msra.mxu0 %v1665
  %1747 = vmatprep.subr.bf16.mxu0 0
  %1748 = vmatpush2.bf16.msra.mxu0 %v1664
  %1749 = vmatprep.subr.bf16.mxu0 0
  %1750 = vmatpush2.bf16.msra.mxu0 %v1663
  %1751 = vmatprep.mubr.bf16.mxu0 %v1399
  %1752 = vmatmul.mubr.bf16.gmra.mxu0 %v1398
  %v1753 = vpop.f32.mrf.mxu0
  %v1754 = vadd.f32 0.0, %v1753
  %v1755 = vpop.f32.mrf.mxu0
  %v1756 = vpop.f32.mrf.mxu0
  %v1757 = vadd.f32 0.0, %v1756
  %v1758 = vpop.f32.mrf.mxu0
  %1759 = vmatprep.mubr.bf16.mxu0 %v1403
  %1760 = vmatmul.mubr.bf16.gmra.mxu0 %v1402
  %v1761 = vpop.f32.mrf.mxu0
  %v1762 = vadd.f32 0.0, %v1761
  %v1763 = vpop.f32.mrf.mxu0
  %v1764 = vpop.f32.mrf.mxu0
  %v1765 = vadd.f32 0.0, %v1764
  %v1766 = vpop.f32.mrf.mxu0
  %1767 = vmatprep.mubr.bf16.mxu0 %v1407
  %1768 = vmatmul.mubr.bf16.gmra.mxu0 %v1406
  %v1769 = vpop.f32.mrf.mxu0
  %v1770 = vadd.f32 0.0, %v1769
  %v1771 = vpop.f32.mrf.mxu0
  %v1772 = vpop.f32.mrf.mxu0
  %v1773 = vadd.f32 0.0, %v1772
  %v1774 = vpop.f32.mrf.mxu0
  %1775 = vmatprep.mubr.bf16.mxu0 %v1411
  %1776 = vmatmul.mubr.bf16.gmra.mxu0 %v1410
  %v1777 = vpop.f32.mrf.mxu0
  %v1778 = vadd.f32 0.0, %v1777
  %v1779 = vpop.f32.mrf.mxu0
  %v1780 = vpop.f32.mrf.mxu0
  %v1781 = vadd.f32 0.0, %v1780
  %v1782 = vpop.f32.mrf.mxu0
  %1783 = vmatprep.mubr.bf16.mxu0 %v1431
  %1784 = vmatmul.mubr.bf16.gmra.mxu0 %v1430
  %v1785 = vpop.f32.mrf.mxu0
  %v1786 = vadd.f32 0.0, %v1785
  %v1787 = vpop.f32.mrf.mxu0
  %v1788 = vpop.f32.mrf.mxu0
  %v1789 = vadd.f32 0.0, %v1788
  %v1790 = vpop.f32.mrf.mxu0
  %1791 = vmatprep.mubr.bf16.mxu0 %v1435
  %1792 = vmatmul.mubr.bf16.gmra.mxu0 %v1434
  %v1793 = vpop.f32.mrf.mxu0
  %v1794 = vadd.f32 0.0, %v1793
  %v1795 = vpop.f32.mrf.mxu0
  %v1796 = vpop.f32.mrf.mxu0
  %v1797 = vadd.f32 0.0, %v1796
  %v1798 = vpop.f32.mrf.mxu0
  %1799 = vmatprep.mubr.bf16.mxu0 %v1439
  %1800 = vmatmul.mubr.bf16.gmra.mxu0 %v1438
  %v1801 = vpop.f32.mrf.mxu0
  %v1802 = vadd.f32 0.0, %v1801
  %v1803 = vpop.f32.mrf.mxu0
  %v1804 = vpop.f32.mrf.mxu0
  %v1805 = vadd.f32 0.0, %v1804
  %v1806 = vpop.f32.mrf.mxu0
  %1807 = vmatprep.mubr.bf16.mxu0 %v1443
  %1808 = vmatmul.mubr.bf16.gmra.mxu0 %v1442
  %v1809 = vpop.f32.mrf.mxu0
  %v1810 = vadd.f32 0.0, %v1809
  %v1811 = vpop.f32.mrf.mxu0
  %v1812 = vpop.f32.mrf.mxu0
  %v1813 = vadd.f32 0.0, %v1812
  %v1814 = vpop.f32.mrf.mxu0
  %1815 = vdwg.mxu0
  %1816 = vmatprep.subr.bf16.mxu0 0
  %1817 = vmatpush1.bf16.msra.mxu0 %v1678
  %1818 = vmatprep.subr.bf16.mxu0 0
  %1819 = vmatpush1.bf16.msra.mxu0 %v1677
  %1820 = vmatprep.subr.bf16.mxu0 0
  %1821 = vmatpush1.bf16.msra.mxu0 %v1676
  %1822 = vmatprep.subr.bf16.mxu0 0
  %1823 = vmatpush1.bf16.msra.mxu0 %v1675
  %1824 = vmatprep.subr.bf16.mxu0 0
  %1825 = vmatpush1.bf16.msra.mxu0 %v1674
  %1826 = vmatprep.subr.bf16.mxu0 0
  %1827 = vmatpush1.bf16.msra.mxu0 %v1673
  %1828 = vmatprep.subr.bf16.mxu0 0
  %1829 = vmatpush1.bf16.msra.mxu0 %v1672
  %1830 = vmatprep.subr.bf16.mxu0 0
  %1831 = vmatpush1.bf16.msra.mxu0 %v1671
  %1832 = vmatprep.subr.bf16.mxu0 0
  %1833 = vmatpush2.bf16.msra.mxu0 %v1686
  %1834 = vmatprep.subr.bf16.mxu0 0
  %1835 = vmatpush2.bf16.msra.mxu0 %v1685
  %1836 = vmatprep.subr.bf16.mxu0 0
  %1837 = vmatpush2.bf16.msra.mxu0 %v1684
  %1838 = vmatprep.subr.bf16.mxu0 0
  %1839 = vmatpush2.bf16.msra.mxu0 %v1683
  %1840 = vmatprep.subr.bf16.mxu0 0
  %1841 = vmatpush2.bf16.msra.mxu0 %v1682
  %1842 = vmatprep.subr.bf16.mxu0 0
  %1843 = vmatpush2.bf16.msra.mxu0 %v1681
  %1844 = vmatprep.subr.bf16.mxu0 0
  %1845 = vmatpush2.bf16.msra.mxu0 %v1680
  %1846 = vmatprep.subr.bf16.mxu0 0
  %1847 = vmatpush2.bf16.msra.mxu0 %v1679
  %1848 = vmatprep.mubr.bf16.mxu0 %v1401
  %1849 = vmatmul.mubr.bf16.gmra.mxu0 %v1400
  %v1850 = vpop.f32.mrf.mxu0
  %v1851 = vadd.f32 %v1754, %v1850
  %v1852 = vpop.f32.mrf.mxu0
  %v1853 = vpop.f32.mrf.mxu0
  %v1854 = vadd.f32 %v1757, %v1853
  %v1855 = vpop.f32.mrf.mxu0
  %1856 = vmatprep.mubr.bf16.mxu0 %v1405
  %1857 = vmatmul.mubr.bf16.gmra.mxu0 %v1404
  %v1858 = vpop.f32.mrf.mxu0
  %v1859 = vadd.f32 %v1762, %v1858
  %v1860 = vpop.f32.mrf.mxu0
  %v1861 = vpop.f32.mrf.mxu0
  %v1862 = vadd.f32 %v1765, %v1861
  %v1863 = vpop.f32.mrf.mxu0
  %1864 = vmatprep.mubr.bf16.mxu0 %v1409
  %1865 = vmatmul.mubr.bf16.gmra.mxu0 %v1408
  %v1866 = vpop.f32.mrf.mxu0
  %v1867 = vadd.f32 %v1770, %v1866
  %v1868 = vpop.f32.mrf.mxu0
  %v1869 = vpop.f32.mrf.mxu0
  %v1870 = vadd.f32 %v1773, %v1869
  %v1871 = vpop.f32.mrf.mxu0
  %1872 = vmatprep.mubr.bf16.mxu0 %v1413
  %1873 = vmatmul.mubr.bf16.gmra.mxu0 %v1412
  %v1874 = vpop.f32.mrf.mxu0
  %v1875 = vadd.f32 %v1778, %v1874
  %v1876 = vpop.f32.mrf.mxu0
  %v1877 = vpop.f32.mrf.mxu0
  %v1878 = vadd.f32 %v1781, %v1877
  %v1879 = vpop.f32.mrf.mxu0
  %1880 = vmatprep.mubr.bf16.mxu0 %v1433
  %1881 = vmatmul.mubr.bf16.gmra.mxu0 %v1432
  %v1882 = vpop.f32.mrf.mxu0
  %v1883 = vadd.f32 %v1786, %v1882
  %v1884 = vpop.f32.mrf.mxu0
  %v1885 = vpop.f32.mrf.mxu0
  %v1886 = vadd.f32 %v1789, %v1885
  %v1887 = vpop.f32.mrf.mxu0
  %1888 = vmatprep.mubr.bf16.mxu0 %v1437
  %1889 = vmatmul.mubr.bf16.gmra.mxu0 %v1436
  %v1890 = vpop.f32.mrf.mxu0
  %v1891 = vadd.f32 %v1794, %v1890
  %v1892 = vpop.f32.mrf.mxu0
  %v1893 = vpop.f32.mrf.mxu0
  %v1894 = vadd.f32 %v1797, %v1893
  %v1895 = vpop.f32.mrf.mxu0
  %1896 = vmatprep.mubr.bf16.mxu0 %v1441
  %1897 = vmatmul.mubr.bf16.gmra.mxu0 %v1440
  %v1898 = vpop.f32.mrf.mxu0
  %v1899 = vadd.f32 %v1802, %v1898
  %v1900 = vpop.f32.mrf.mxu0
  %v1901 = vpop.f32.mrf.mxu0
  %v1902 = vadd.f32 %v1805, %v1901
  %v1903 = vpop.f32.mrf.mxu0
  %1904 = vmatprep.mubr.bf16.mxu0 %v1445
  %1905 = vmatmul.mubr.bf16.gmra.mxu0 %v1444
  %v1906 = vpop.f32.mrf.mxu0
  %v1907 = vadd.f32 %v1810, %v1906
  %v1908 = vpop.f32.mrf.mxu0
  %v1909 = vpop.f32.mrf.mxu0
  %v1910 = vadd.f32 %v1813, %v1909
  %v1911 = vpop.f32.mrf.mxu0
  %1912 = vdwg.mxu0
  %v1913 = vadd.f32 %v959, %v1851
  %v1914 = vadd.f32 %v960, %v1854
  %v1915 = vadd.f32 %v961, %v1859
  %v1916 = vadd.f32 %v962, %v1862
  %v1917 = vadd.f32 %v963, %v1867
  %v1918 = vadd.f32 %v964, %v1870
  %v1919 = vadd.f32 %v965, %v1875
  %v1920 = vadd.f32 %v966, %v1878
  %v1921 = vadd.f32 %v967, %v1883
  %v1922 = vadd.f32 %v968, %v1886
  %v1923 = vadd.f32 %v969, %v1891
  %v1924 = vadd.f32 %v970, %v1894
  %v1925 = vadd.f32 %v971, %v1899
  %v1926 = vadd.f32 %v972, %v1902
  %v1927 = vadd.f32 %v973, %v1907
  %v1928 = vadd.f32 %v974, %v1910
  %1929 = vxpose.xlu0.b32.start [1/16] %v1913, 128
  %1930 = vxpose.xlu0.b32.cont [2/16] %v1914, 128
  %1931 = vxpose.xlu0.b32.cont [3/16] %v1915, 128
  %1932 = vxpose.xlu0.b32.cont [4/16] %v1916, 128
  %1933 = vxpose.xlu0.b32.cont [5/16] %v1917, 128
  %1934 = vxpose.xlu0.b32.cont [6/16] %v1918, 128
  %1935 = vxpose.xlu0.b32.cont [7/16] %v1919, 128
  %1936 = vxpose.xlu0.b32.cont [8/16] %v1920, 128
  %1937 = vxpose.xlu0.b32.cont [9/16] 0.0, 128
  %1938 = vxpose.xlu0.b32.cont [10/16] 0.0, 128
  %1939 = vxpose.xlu0.b32.cont [11/16] 0.0, 128
  %1940 = vxpose.xlu0.b32.cont [12/16] 0.0, 128
  %1941 = vxpose.xlu0.b32.cont [13/16] 0.0, 128
  %1942 = vxpose.xlu0.b32.cont [14/16] 0.0, 128
  %1943 = vxpose.xlu0.b32.cont [15/16] 0.0, 128
  %1944 = vxpose.xlu0.b32.end [16/16] 0.0, 128
  %v1945 = vpop.trf.xlu0
  %v1946 = vpop.trf.xlu0
  %v1947 = vpop.trf.xlu0
  %v1948 = vpop.trf.xlu0
  %v1949 = vpop.trf.xlu0
  %v1950 = vpop.trf.xlu0
  %v1951 = vpop.trf.xlu0
  %v1952 = vpop.trf.xlu0
  %v1953 = vpop.trf.xlu0
  %v1954 = vpop.trf.xlu0
  %v1955 = vpop.trf.xlu0
  %v1956 = vpop.trf.xlu0
  %v1957 = vpop.trf.xlu0
  %v1958 = vpop.trf.xlu0
  %v1959 = vpop.trf.xlu0
  %v1960 = vpop.trf.xlu0
  %vm1961 = vcmask 523264
  %1962 = vst.msk [vmem:[%s3] sm:$0xff] %vm1961, %v1945
  %1963 = vst.msk [vmem:[%s3 + $0x8] sm:$0xff] %vm1961, %v1946
  %1964 = vst.msk [vmem:[%s3 + $0x10] sm:$0xff] %vm1961, %v1947
  %1965 = vst.msk [vmem:[%s3 + $0x18] sm:$0xff] %vm1961, %v1948
  %1966 = vst.msk [vmem:[%s3 + $0x20] sm:$0xff] %vm1961, %v1949
  %1967 = vst.msk [vmem:[%s3 + $0x28] sm:$0xff] %vm1961, %v1950
  %1968 = vst.msk [vmem:[%s3 + $0x30] sm:$0xff] %vm1961, %v1951
  %1969 = vst.msk [vmem:[%s3 + $0x38] sm:$0xff] %vm1961, %v1952
  %1970 = vxpose.xlu0.b32.start [1/16] %v1921, 128
  %1971 = vxpose.xlu0.b32.cont [2/16] %v1922, 128
  %1972 = vxpose.xlu0.b32.cont [3/16] %v1923, 128
  %1973 = vxpose.xlu0.b32.cont [4/16] %v1924, 128
  %1974 = vxpose.xlu0.b32.cont [5/16] %v1925, 128
  %1975 = vxpose.xlu0.b32.cont [6/16] %v1926, 128
  %1976 = vxpose.xlu0.b32.cont [7/16] %v1927, 128
  %1977 = vxpose.xlu0.b32.cont [8/16] %v1928, 128
  %1978 = vxpose.xlu0.b32.cont [9/16] 0.0, 128
  %1979 = vxpose.xlu0.b32.cont [10/16] 0.0, 128
  %1980 = vxpose.xlu0.b32.cont [11/16] 0.0, 128
  %1981 = vxpose.xlu0.b32.cont [12/16] 0.0, 128
  %1982 = vxpose.xlu0.b32.cont [13/16] 0.0, 128
  %1983 = vxpose.xlu0.b32.cont [14/16] 0.0, 128
  %1984 = vxpose.xlu0.b32.cont [15/16] 0.0, 128
  %1985 = vxpose.xlu0.b32.end [16/16] 0.0, 128
  %v1986 = vpop.trf.xlu0
  %v1987 = vpop.trf.xlu0
  %v1988 = vpop.trf.xlu0
  %v1989 = vpop.trf.xlu0
  %v1990 = vpop.trf.xlu0
  %v1991 = vpop.trf.xlu0
  %v1992 = vpop.trf.xlu0
  %v1993 = vpop.trf.xlu0
  %v1994 = vpop.trf.xlu0
  %v1995 = vpop.trf.xlu0
  %v1996 = vpop.trf.xlu0
  %v1997 = vpop.trf.xlu0
  %v1998 = vpop.trf.xlu0
  %v1999 = vpop.trf.xlu0
  %v2000 = vpop.trf.xlu0
  %v2001 = vpop.trf.xlu0
  %s2002 = scalar_lea.vmem %s3, 64
  %2003 = vst.msk [vmem:[%s2002] sm:$0xff] %vm1961, %v1986
  %2004 = vst.msk [vmem:[%s2002 + $0x8] sm:$0xff] %vm1961, %v1987
  %2005 = vst.msk [vmem:[%s2002 + $0x10] sm:$0xff] %vm1961, %v1988
  %2006 = vst.msk [vmem:[%s2002 + $0x18] sm:$0xff] %vm1961, %v1989
  %2007 = vst.msk [vmem:[%s2002 + $0x20] sm:$0xff] %vm1961, %v1990
  %2008 = vst.msk [vmem:[%s2002 + $0x28] sm:$0xff] %vm1961, %v1991
  %2009 = vst.msk [vmem:[%s2002 + $0x30] sm:$0xff] %vm1961, %v1992
  %2010 = vst.msk [vmem:[%s2002 + $0x38] sm:$0xff] %vm1961, %v1993
  // Predicated region
  $region14: #{_unnamed_function_.1} parent=0 // pred_check
    _
  $region15: #{_unnamed_function_.1} parent=0 // pred_check_branch
    %2012 = sbr.rel (0) target = $region17
  $region16: #{_unnamed_function_.1} parent=0 // pred_region
    _
  $region17: #{_unnamed_function_.1} parent=0 // pred_fallthru
    _
  // Predicated region
  $region18: #{_unnamed_function_.1} parent=0 // pred_check
    _
  $region19: #{_unnamed_function_.1} parent=0 // pred_check_branch
    %2014 = sbr.rel (0) target = $region21
  $region20: #{_unnamed_function_.1} parent=0 // pred_region
    _
  $region21: #{_unnamed_function_.1} parent=0 // pred_fallthru
    _

</llo_original>
